<compile_context>
chip_gen: v6e
topology: v6e:2x2x1
jax: 0.10.0
libtpu: 0.0.40
codegen_flags: <defaults>
</compile_context>

<pallas_src>
import functools

import jax
import jax.numpy as jnp
from jax.experimental import pallas as pl
from jax.experimental.pallas import tpu as pltpu


def _warp_kernel(x_ref, flow_ref, coord_ref, o_ref, *, C, H, W, Pt):
    """Per-(batch, pixel-tile) warping.

    x_ref:     (1, C*H, W)  input image, resident per batch (rows = (c, h))
    flow_ref:  (1, 2, Pt)   flow tile (row 0 = dx in pixels, row 1 = dy)
    coord_ref: (2, Pt)      f32 flattened pixel coords (row 0 = w idx, row 1 = h idx)
    o_ref:     (1, C, Pt)   warped output tile
    """
    x2 = x_ref[0].astype(jnp.float32)                  # (C*H, W)
    fx = flow_ref[0, 0:1, :].astype(jnp.float32)       # (1, Pt)
    fy = flow_ref[0, 1:2, :].astype(jnp.float32)       # (1, Pt)
    wi = coord_ref[0:1, :]                             # (1, Pt)  column index
    hi = coord_ref[1:2, :]                             # (1, Pt)  row index

    # Base sampling grid (torch.linspace(-1, 1, size) per axis), flattened.
    base_x = -1.0 + 2.0 * wi / (W - 1.0)
    base_y = -1.0 + 2.0 * hi / (H - 1.0)
    # flow_for_grip = flow / ((size - 1) / 2); grid = base + flow_for_grip.
    gx = base_x + fx * (2.0 / (W - 1.0))
    gy = base_y + fy * (2.0 / (H - 1.0))
    # Unnormalize (align_corners=False): g in [-1,1] -> ((g+1)*S - 1)/2 pixels.
    ix = ((gx + 1.0) * W - 1.0) * 0.5
    iy = ((gy + 1.0) * H - 1.0) * 0.5

    ix0f = jnp.floor(ix)
    iy0f = jnp.floor(iy)
    wx1 = ix - ix0f
    wx0 = 1.0 - wx1
    wy1 = iy - iy0f
    wy0 = 1.0 - wy1
    # Note: the int32 cast saturates for astronomically large |flow|; saturated
    # indices never match an iota row, so those samples just get zeros-padding.
    ix0 = ix0f.astype(jnp.int32)
    iy0 = iy0f.astype(jnp.int32)

    # x-stage 2-tap stencil (W, Pt). Out-of-range taps never match an iota row
    # -> they contribute zero (grid_sample padding_mode='zeros' for free).
    w_iota = jax.lax.broadcasted_iota(jnp.int32, (W, Pt), 0)
    cx = (jnp.where(w_iota == ix0, wx0, 0.0)
          + jnp.where(w_iota == ix0 + 1, wx1, 0.0))    # (W, Pt)

    # Row-interpolate every (c, h) source row on the MXU.  Precision pinned so
    # the f32 matmul is never silently lowered to fewer bf16 passes.
    t_rows = jax.lax.dot_general(
        x2, cx, (((1,), (0,)), ((), ())),
        precision=jax.lax.Precision.HIGHEST,
        preferred_element_type=jnp.float32)            # (C*H, Pt)

    # y-stage 2-tap stencil, built ONCE at (H, Pt): no % H, no C-fold copies.
    h_iota = jax.lax.broadcasted_iota(jnp.int32, (H, Pt), 0)
    ry = (jnp.where(h_iota == iy0, wy0, 0.0)
          + jnp.where(h_iota == iy0 + 1, wy1, 0.0))    # (H, Pt)

    # out[c, p] = sum_h t_rows[c*H + h, p] * ry[h, p]   (no group-sum matmul).
    u = t_rows.reshape(C, H, Pt) * ry[None, :, :]      # (C, H, Pt)
    o_ref[0] = jnp.sum(u, axis=1).astype(o_ref.dtype)  # (C, Pt)


def _round_up(v, m):
    return -(-int(v) // m) * m


def warping_layer(x, flow, *, pixel_tile=None):
    """Pallas implementation of WarpingLayer.forward(x, flow)."""
    N, C, H, W = x.shape
    assert flow.shape == (N, 2, H, W)
    assert H > 1 and W > 1, "WarpingLayer requires H > 1 and W > 1"
    P = H * W

    x_itemsize = jnp.dtype(x.dtype).itemsize
    f_itemsize = jnp.dtype(flow.dtype).itemsize

    lane = lambda v: _round_up(max(v, 1), 128)   # lane padding
    sub = lambda v: _round_up(max(v, 1), 8)      # sublane padding

    def vmem_footprint(pt):
        f32 = 4
        slab = 2 * sub(C * H) * lane(W) * x_itemsize            # x block (double-buffered)
        flow_b = 2 * sub(2) * lane(pt) * f_itemsize             # flow tile (db)
        coord_b = 2 * sub(2) * lane(pt) * f32                   # coord tile (db)
        out_b = 2 * sub(C) * lane(pt) * x_itemsize              # output tile (db)
        # f32 temporaries: cx, t_rows, ry, u (+ a few (1, Pt) scratch rows).
        tmps = (sub(W) + sub(C * H) + sub(H) + C * sub(H) + 8) * lane(pt) * f32
        return slab + flow_b + coord_b + out_b + tmps

    # Per-generation VMEM budget: ~48 MiB on 64-MiB parts (v7x), ~96 MiB on
    # 128-MiB parts (v5e/v6e), leaving headroom for Mosaic internal scratch.
    try:
        vmem_cap = int(getattr(pltpu.get_tpu_info(), "vmem_capacity_bytes", 128 << 20))
    except Exception:
        vmem_cap = 128 << 20
    budget = (48 << 20) if vmem_cap <= (64 << 20) else (96 << 20)

    if pixel_tile is None:
        if P % 128 == 0:
            pixel_tile = 128
            # Largest lane-aligned tile that fits (prefer multiples of 256).
            for cand in (2048, 1536, 1024, 768, 512, 384, 256, 128):
                if P % cand == 0 and 2 * vmem_footprint(cand) <= budget:
                    pixel_tile = cand
                    break
        else:
            pixel_tile = P
    Pt = pixel_tile
    assert P % Pt == 0 and (Pt % 128 == 0 or Pt == P)
    n_tiles = P // Pt

    vmem_limit = int(min(budget, max(32 << 20, 2 * vmem_footprint(Pt))))

    x2 = x.reshape(N, C * H, W)              # rows ordered as (c, h)
    flow_flat = flow.reshape(N, 2, P)
    # Flow-independent flattened pixel coordinates (computed once, outside the
    # kernel): removes all integer div/mod from the per-tile body.
    pidx = jnp.arange(P, dtype=jnp.int32)
    coords = jnp.stack([(pidx % W).astype(jnp.float32),
                        (pidx // W).astype(jnp.float32)], axis=0)   # (2, P)

    cost = pl.CostEstimate(
        flops=int(N * P * (2 * C * H * W + 2 * C * H) + 32 * N * P),
        transcendentals=0,
        bytes_accessed=int(2 * x.size * x_itemsize + flow.size * f_itemsize
                           + N * 2 * P * 4),
    )

    kernel = functools.partial(_warp_kernel, C=C, H=H, W=W, Pt=Pt)
    out_flat = pl.pallas_call(
        kernel,
        out_shape=jax.ShapeDtypeStruct((N, C, P), x.dtype),
        grid_spec=pltpu.PrefetchScalarGridSpec(
            num_scalar_prefetch=0,
            grid=(N, n_tiles),
            in_specs=[
                # x slab: resident per batch (block index constant over t).
                pl.BlockSpec((1, C * H, W), lambda n, t: (n, 0, 0)),
                pl.BlockSpec((1, 2, Pt), lambda n, t: (n, 0, t)),
                pl.BlockSpec((2, Pt), lambda n, t: (0, t)),
            ],
            out_specs=pl.BlockSpec((1, C, Pt), lambda n, t: (n, 0, t)),
        ),
        compiler_params=pltpu.CompilerParams(
            # Batch axis is the megacore-sharded one (v7x); the tile axis stays
            # sequential within a core so the resident x slab is fetched once.
            dimension_semantics=("parallel", "arbitrary"),
            vmem_limit_bytes=vmem_limit,
        ),
        cost_estimate=cost,
    )(x2, flow_flat, coords)
    return out_flat.reshape(N, C, H, W)


def _reference_warp(x, flow):
    """Pure-JAX reference (grid_sample, bilinear, zeros padding, align_corners=False)."""
    N, C, H, W = x.shape
    ws = jnp.linspace(-1.0, 1.0, W)
    hs = jnp.linspace(-1.0, 1.0, H)
    base_x = jnp.broadcast_to(ws[None, None, :], (N, H, W))
    base_y = jnp.broadcast_to(hs[None, :, None], (N, H, W))
    gx = base_x + flow[:, 0] * (2.0 / (W - 1.0))
    gy = base_y + flow[:, 1] * (2.0 / (H - 1.0))
    ix = ((gx + 1.0) * W - 1.0) * 0.5
    iy = ((gy + 1.0) * H - 1.0) * 0.5
    ix0 = jnp.floor(ix)
    iy0 = jnp.floor(iy)
    wx1 = ix - ix0
    wx0 = 1.0 - wx1
    wy1 = iy - iy0
    wy0 = 1.0 - wy1
    xf = x.reshape(N, C, H * W)

    def tap(cy, cx, w):
        valid = ((cx >= 0) & (cx <= W - 1) & (cy >= 0) & (cy <= H - 1))
        q = (jnp.clip(cy, 0, H - 1) * W + jnp.clip(cx, 0, W - 1)).astype(jnp.int32)
        q = q.reshape(N, 1, H * W)
        vals = jnp.take_along_axis(xf, jnp.broadcast_to(q, (N, C, H * W)), axis=2)
        return vals * (w * valid.astype(x.dtype)).reshape(N, 1, H * W)

    out = (tap(iy0, ix0, wy0 * wx0) + tap(iy0, ix0 + 1, wy0 * wx1)
           + tap(iy0 + 1, ix0, wy1 * wx0) + tap(iy0 + 1, ix0 + 1, wy1 * wx1))
    return out.reshape(N, C, H, W)


if __name__ == "__main__":
    key = jax.random.PRNGKey(0)
    kx, kf = jax.random.split(key)
    N, C, H, W = 2, 4, 16, 16
    x = jax.random.normal(kx, (N, C, H, W), dtype=jnp.float32)
    # flow in pixel units; large enough to push some samples out of bounds
    flow = 3.0 * jax.random.normal(kf, (N, 2, H, W), dtype=jnp.float32)

    out = warping_layer(x, flow)
    out = jax.block_until_ready(out)

    ref = _reference_warp(x, flow)
    assert out.shape == (N, C, H, W)
    assert jnp.allclose(out, ref, atol=1e-5, rtol=1e-5), "mismatch vs reference"

    print("KERNEL_OK")
</pallas_src>

<mosaic_0001>
module attributes {stable_mosaic.version = 11 : i64} {
  func.func @_warp_kernel(%arg0: i32, %arg1: i32, %arg2: memref<1x64x16xf32, #tpu.memory_space<vmem>>, %arg3: memref<1x2x256xf32, #tpu.memory_space<vmem>>, %arg4: memref<2x256xf32, #tpu.memory_space<vmem>>, %arg5: memref<1x4x256xf32, #tpu.memory_space<vmem>>) attributes {dimension_semantics = [#tpu.dimension_semantics<parallel>, #tpu.dimension_semantics<arbitrary>], iteration_bounds = array<i64: 2, 1>, scalar_prefetch = 0 : i64, scratch_operands = 0 : i64, tpu.core_type = #tpu.core_type<tc>, window_params = [{transform_indices = @transform_0, window_bounds = array<i64: 1, 64, 16>}, {transform_indices = @transform_1, window_bounds = array<i64: 1, 2, 256>}, {transform_indices = @transform_2, window_bounds = array<i64: 2, 256>}, {transform_indices = @transform_3, window_bounds = array<i64: 1, 4, 256>}]} {
    %c0 = arith.constant 0 : index
    %c0_0 = arith.constant 0 : index
    %c0_1 = arith.constant 0 : index
    %0 = vector.load %arg2[%c0, %c0_0, %c0_1] : memref<1x64x16xf32, #tpu.memory_space<vmem>>, vector<1x64x16xf32>
    %1 = vector.shape_cast %0 : vector<1x64x16xf32> to vector<64x16xf32>
    %c0_2 = arith.constant 0 : index
    %c0_3 = arith.constant 0 : index
    %c0_4 = arith.constant 0 : index
    %2 = vector.load %arg3[%c0_2, %c0_3, %c0_4] : memref<1x2x256xf32, #tpu.memory_space<vmem>>, vector<1x1x256xf32>
    %3 = vector.shape_cast %2 : vector<1x1x256xf32> to vector<1x256xf32>
    %c0_5 = arith.constant 0 : index
    %c1 = arith.constant 1 : index
    %c0_6 = arith.constant 0 : index
    %4 = vector.load %arg3[%c0_5, %c1, %c0_6] : memref<1x2x256xf32, #tpu.memory_space<vmem>>, vector<1x1x256xf32>
    %5 = vector.shape_cast %4 : vector<1x1x256xf32> to vector<1x256xf32>
    %c0_7 = arith.constant 0 : index
    %c0_8 = arith.constant 0 : index
    %6 = vector.load %arg4[%c0_7, %c0_8] : memref<2x256xf32, #tpu.memory_space<vmem>>, vector<1x256xf32>
    %c1_9 = arith.constant 1 : index
    %c0_10 = arith.constant 0 : index
    %7 = vector.load %arg4[%c1_9, %c0_10] : memref<2x256xf32, #tpu.memory_space<vmem>>, vector<1x256xf32>
    %cst = arith.constant 2.000000e+00 : f32
    %8 = vector.broadcast %cst : f32 to vector<1x256xf32>
    %9 = arith.mulf %8, %6 : vector<1x256xf32>
    %cst_11 = arith.constant 1.500000e+01 : f32
    %10 = vector.broadcast %cst_11 : f32 to vector<1x256xf32>
    %11 = arith.divf %9, %10 : vector<1x256xf32>
    %cst_12 = arith.constant -1.000000e+00 : f32
    %12 = vector.broadcast %cst_12 : f32 to vector<1x256xf32>
    %13 = arith.addf %12, %11 : vector<1x256xf32>
    %cst_13 = arith.constant 2.000000e+00 : f32
    %14 = vector.broadcast %cst_13 : f32 to vector<1x256xf32>
    %15 = arith.mulf %14, %7 : vector<1x256xf32>
    %cst_14 = arith.constant 1.500000e+01 : f32
    %16 = vector.broadcast %cst_14 : f32 to vector<1x256xf32>
    %17 = arith.divf %15, %16 : vector<1x256xf32>
    %cst_15 = arith.constant -1.000000e+00 : f32
    %18 = vector.broadcast %cst_15 : f32 to vector<1x256xf32>
    %19 = arith.addf %18, %17 : vector<1x256xf32>
    %cst_16 = arith.constant 0.13333334 : f32
    %20 = vector.broadcast %cst_16 : f32 to vector<1x256xf32>
    %21 = arith.mulf %3, %20 : vector<1x256xf32>
    %22 = arith.addf %13, %21 : vector<1x256xf32>
    %cst_17 = arith.constant 0.13333334 : f32
    %23 = vector.broadcast %cst_17 : f32 to vector<1x256xf32>
    %24 = arith.mulf %5, %23 : vector<1x256xf32>
    %25 = arith.addf %19, %24 : vector<1x256xf32>
    %cst_18 = arith.constant 1.000000e+00 : f32
    %26 = vector.broadcast %cst_18 : f32 to vector<1x256xf32>
    %27 = arith.addf %22, %26 : vector<1x256xf32>
    %cst_19 = arith.constant 1.600000e+01 : f32
    %28 = vector.broadcast %cst_19 : f32 to vector<1x256xf32>
    %29 = arith.mulf %27, %28 : vector<1x256xf32>
    %cst_20 = arith.constant 1.000000e+00 : f32
    %30 = vector.broadcast %cst_20 : f32 to vector<1x256xf32>
    %31 = arith.subf %29, %30 : vector<1x256xf32>
    %cst_21 = arith.constant 5.000000e-01 : f32
    %32 = vector.broadcast %cst_21 : f32 to vector<1x256xf32>
    %33 = arith.mulf %31, %32 : vector<1x256xf32>
    %cst_22 = arith.constant 1.000000e+00 : f32
    %34 = vector.broadcast %cst_22 : f32 to vector<1x256xf32>
    %35 = arith.addf %25, %34 : vector<1x256xf32>
    %cst_23 = arith.constant 1.600000e+01 : f32
    %36 = vector.broadcast %cst_23 : f32 to vector<1x256xf32>
    %37 = arith.mulf %35, %36 : vector<1x256xf32>
    %cst_24 = arith.constant 1.000000e+00 : f32
    %38 = vector.broadcast %cst_24 : f32 to vector<1x256xf32>
    %39 = arith.subf %37, %38 : vector<1x256xf32>
    %cst_25 = arith.constant 5.000000e-01 : f32
    %40 = vector.broadcast %cst_25 : f32 to vector<1x256xf32>
    %41 = arith.mulf %39, %40 : vector<1x256xf32>
    %42 = math.floor %33 : vector<1x256xf32>
    %43 = math.floor %41 : vector<1x256xf32>
    %44 = arith.subf %33, %42 : vector<1x256xf32>
    %cst_26 = arith.constant 1.000000e+00 : f32
    %45 = vector.broadcast %cst_26 : f32 to vector<1x256xf32>
    %46 = arith.subf %45, %44 : vector<1x256xf32>
    %47 = arith.subf %41, %43 : vector<1x256xf32>
    %cst_27 = arith.constant 1.000000e+00 : f32
    %48 = vector.broadcast %cst_27 : f32 to vector<1x256xf32>
    %49 = arith.subf %48, %47 : vector<1x256xf32>
    %50 = arith.fptosi %42 : vector<1x256xf32> to vector<1x256xi32>
    %51 = arith.fptosi %43 : vector<1x256xf32> to vector<1x256xi32>
    %52 = tpu.iota {dimensions = array<i32: 0>} : vector<16x256xi32>
    %53 = vector.broadcast %50 : vector<1x256xi32> to vector<16x256xi32>
    %54 = arith.cmpi eq, %52, %53 : vector<16x256xi32>
    %cst_28 = arith.constant 0.000000e+00 : f32
    %55 = vector.shape_cast %46 : vector<1x256xf32> to vector<1x256xf32>
    %56 = vector.broadcast %55 : vector<1x256xf32> to vector<16x256xf32>
    %57 = vector.broadcast %cst_28 : f32 to vector<16x256xf32>
    %58 = arith.select %54, %56, %57 : vector<16x256xi1>, vector<16x256xf32>
    %c1_i32 = arith.constant 1 : i32
    %59 = vector.broadcast %c1_i32 : i32 to vector<1x256xi32>
    %60 = arith.addi %50, %59 : vector<1x256xi32>
    %61 = vector.broadcast %60 : vector<1x256xi32> to vector<16x256xi32>
    %62 = arith.cmpi eq, %52, %61 : vector<16x256xi32>
    %cst_29 = arith.constant 0.000000e+00 : f32
    %63 = vector.shape_cast %44 : vector<1x256xf32> to vector<1x256xf32>
    %64 = vector.broadcast %63 : vector<1x256xf32> to vector<16x256xf32>
    %65 = vector.broadcast %cst_29 : f32 to vector<16x256xf32>
    %66 = arith.select %62, %64, %65 : vector<16x256xi1>, vector<16x256xf32>
    %67 = arith.addf %58, %66 : vector<16x256xf32>
    %cst_30 = arith.constant dense<0.000000e+00> : vector<64x256xf32>
    %68 = tpu.matmul %1, %67, %cst_30 {dimension_numbers = #tpu.dot_dimension_numbers<[1], [0], [0], [1], [0, 0, 1, 1], [], []>, precision = #tpu.contract_precision<fp32>} : vector<64x16xf32>, vector<16x256xf32>, vector<64x256xf32> -> vector<64x256xf32>
    %69 = tpu.iota {dimensions = array<i32: 0>} : vector<16x256xi32>
    %70 = vector.broadcast %51 : vector<1x256xi32> to vector<16x256xi32>
    %71 = arith.cmpi eq, %69, %70 : vector<16x256xi32>
    %cst_31 = arith.constant 0.000000e+00 : f32
    %72 = vector.shape_cast %49 : vector<1x256xf32> to vector<1x256xf32>
    %73 = vector.broadcast %72 : vector<1x256xf32> to vector<16x256xf32>
    %74 = vector.broadcast %cst_31 : f32 to vector<16x256xf32>
    %75 = arith.select %71, %73, %74 : vector<16x256xi1>, vector<16x256xf32>
    %c1_i32_32 = arith.constant 1 : i32
    %76 = vector.broadcast %c1_i32_32 : i32 to vector<1x256xi32>
    %77 = arith.addi %51, %76 : vector<1x256xi32>
    %78 = vector.broadcast %77 : vector<1x256xi32> to vector<16x256xi32>
    %79 = arith.cmpi eq, %69, %78 : vector<16x256xi32>
    %cst_33 = arith.constant 0.000000e+00 : f32
    %80 = vector.shape_cast %47 : vector<1x256xf32> to vector<1x256xf32>
    %81 = vector.broadcast %80 : vector<1x256xf32> to vector<16x256xf32>
    %82 = vector.broadcast %cst_33 : f32 to vector<16x256xf32>
    %83 = arith.select %79, %81, %82 : vector<16x256xi1>, vector<16x256xf32>
    %84 = arith.addf %75, %83 : vector<16x256xf32>
    %85 = vector.shape_cast %68 : vector<64x256xf32> to vector<4x16x256xf32>
    %86 = vector.shape_cast %84 : vector<16x256xf32> to vector<1x16x256xf32>
    %87 = vector.broadcast %86 : vector<1x16x256xf32> to vector<4x16x256xf32>
    %88 = arith.mulf %85, %87 : vector<4x16x256xf32>
    %cst_34 = arith.constant dense<0.000000e+00> : vector<4x256xf32>
    %89 = vector.multi_reduction <add>, %88, %cst_34 [1] : vector<4x16x256xf32> to vector<4x256xf32>
    %c0_35 = arith.constant 0 : index
    %c0_36 = arith.constant 0 : index
    %c0_37 = arith.constant 0 : index
    %90 = vector.load %arg5[%c0_35, %c0_36, %c0_37] : memref<1x4x256xf32, #tpu.memory_space<vmem>>, vector<1x4x256xf32>
    %91 = vector.shape_cast %90 : vector<1x4x256xf32> to vector<4x256xf32>
    %92 = vector.shape_cast %89 : vector<4x256xf32> to vector<1x4x256xf32>
    tpu.vector_store %arg5[%c0_35, %c0_36, %c0_37], %92 {strides = array<i32>} : memref<1x4x256xf32, #tpu.memory_space<vmem>>, vector<1x4x256xf32>,
    return
  }
  func.func @transform_0(%arg0: i32, %arg1: i32) -> (i32, i32, i32) {
    %c0_i32 = arith.constant 0 : i32
    %c0_i32_0 = arith.constant 0 : i32
    %c0_i32_1 = arith.constant 0 : i32
    return %arg0, %c0_i32, %c0_i32_0 : i32, i32, i32
  }
  func.func @transform_1(%arg0: i32, %arg1: i32) -> (i32, i32, i32) {
    %c0_i32 = arith.constant 0 : i32
    %c0_i32_0 = arith.constant 0 : i32
    return %arg0, %c0_i32, %arg1 : i32, i32, i32
  }
  func.func @transform_2(%arg0: i32, %arg1: i32) -> (i32, i32) {
    %c0_i32 = arith.constant 0 : i32
    %c0_i32_0 = arith.constant 0 : i32
    return %c0_i32, %arg1 : i32, i32
  }
  func.func @transform_3(%arg0: i32, %arg1: i32) -> (i32, i32, i32) {
    %c0_i32 = arith.constant 0 : i32
    %c0_i32_0 = arith.constant 0 : i32
    return %arg0, %c0_i32, %arg1 : i32, i32, i32
  }
}

</mosaic_0001>

<llo_original>
// kernel: tpu_custom_call.1
$region0: #{tpu_custom_call.1}
  #allocation0 [shape = 'u32[]', space=smem, size = 0x4, offset = 0x4, fixed_abs, tag = 'smem constant byte address 0x4 - core index']
  #allocation1 [shape = 'u32[144,128]{1,0:T(1,128)}', space=vmem, size = 0x12000, scoped, tag = 'internal scratch']
  %s0 = inlined_call_operand.vmem [shape: f32[2,64,16], index: 0, kind: input, shape index: {}]
  %s1 = inlined_call_operand.vmem [shape: f32[2,2,256], index: 1, kind: input, shape index: {}]
  %s2 = inlined_call_operand.vmem [shape: f32[2,256], index: 2, kind: input, shape index: {}]
  %s3 = inlined_call_operand.hbm [shape: f32[2,4,256], index: 3, kind: output, shape index: {}]
  %s4 = sld [smem:[#allocation0]]
  $region45: #{tpu_custom_call.1} parent=0
    _
  %s6 = ssub.s32 1, %s4
  %s7 = scalar_select 0, %s6, %s4
  $region1: #{tpu_custom_call.1} parent=0
    #allocation2 [shape = 'u8[8192]{0}', space=vmem, size = 0x2000, scoped, tag = 'output window, operand 0']
    #allocation3 [shape = 's32[2]{0}', space=sflag, size = 0x8, scoped, tag = 'scoped memory for tpu_custom_call.1']
    %8 = vsyncpa [#allocation3], 0
    %s9 = scalar_lea.sflag [#allocation3], 1
    %10 = vsyncpa %s9, 0
    loop: start=0, step=1, limit=4
    $region2: #{tpu_custom_call.1} parent=1 // loop_pre_header
      _
    $region3: #{tpu_custom_call.1} parent=1 // loop_header
      %s12 = sphi 0, %s16
      %p13 = scmp.ge.s32.totalorder %s12, 4
      %s19 = sphi 0, %s31
      %s20 = sphi 0, %s27
      %s21 = sphi 0, %s19
      %s22 = sphi 0, %s20
      %s23 = sphi 0, %s21
      %s24 = sphi 0, %s22
      %s34 = sphi 0, %s36
      %s37 = sphi 0, %s34
      %s38 = sphi 0, %s37
      %s54 = sphi 0, %s38
      %s62 = sphi 0, %s64
      %s65 = sphi 0, %s62
      %s66 = sphi 0, %s65
      %s82 = sphi 0, %s66
      %s88 = sphi 0, %s90
      %s91 = sphi 0, %s88
      %s92 = sphi 0, %s91
      %s108 = sphi 0, %s92
      %s116 = sphi 0, %s118
      %s119 = sphi 0, %s116
      %s120 = sphi 0, %s119
      %s136 = sphi 0, %s120
    $region4: #{tpu_custom_call.1} parent=1 // loop_header_branch
      %15 = sbr.rel (%p13) target = $region8
    $region5: #{tpu_custom_call.1} parent=1 // loop_body
      %s17 = ssub.s32 %s12, 1
      %s18 = ssub.s32 %s12, 2
      %s25 = sadd.s32 1, %s20
      %p26 = scmp.ge.s32.totalorder %s25, 1
      %s27 = scalar_select %p26, 0, %s25
      %s28 = sadd.s32 1, %s19
      %s29 = scalar_select %p26, %s28, %s19
      %p30 = scmp.ge.s32.totalorder %s29, 2
      %s31 = scalar_select %p30, 0, %s29
      %s32 = ssub.s32 %s19, %s31
      %p33 = scmp.eq.s32.totalorder %s32, 0
      %s35 = sadd.s32 %s34, 1
      %s36 = scalar_select %p33, %s34, %s35
      %p39 = pneg %p33
      %p40 = scmp.eq.s32.totalorder %s12, 1
      %p41 = por %p39, %p40
      %p42 = scmp.ne.s32.totalorder %s34, %s37
      %p43 = scmp.eq.s32.totalorder %s12, 0
      %p44 = por %p42, %p43
      %p45 = scmp.ne.s32.totalorder %s34, %s37
      %p46 = scmp.eq.s32.totalorder %s17, 1
      %p47 = por %p45, %p46
      %p48 = scmp.ne.s32.totalorder %s37, %s38
      %p49 = scmp.eq.s32.totalorder %s17, 0
      %p50 = por %p48, %p49
      %p51 = scmp.ne.s32.totalorder %s37, %s38
      %p52 = scmp.eq.s32.totalorder %s18, 1
      %p53 = por %p51, %p52
      %p55 = scmp.ne.s32.totalorder %s38, %s54
      %p56 = scmp.eq.s32.totalorder %s18, 0
      %p57 = por %p55, %p56
      %s58 = ssub.s32 %s19, %s31
      %s59 = ssub.s32 %s20, %s27
      %s60 = sor.u32 %s58, %s59
      %p61 = scmp.eq.s32.totalorder %s60, 0
      %s63 = sadd.s32 %s62, 1
      %s64 = scalar_select %p61, %s62, %s63
      %p67 = pneg %p61
      %p68 = scmp.eq.s32.totalorder %s12, 1
      %p69 = por %p67, %p68
      %p70 = scmp.ne.s32.totalorder %s62, %s65
      %p71 = scmp.eq.s32.totalorder %s12, 0
      %p72 = por %p70, %p71
      %p73 = scmp.ne.s32.totalorder %s62, %s65
      %p74 = scmp.eq.s32.totalorder %s17, 1
      %p75 = por %p73, %p74
      %p76 = scmp.ne.s32.totalorder %s65, %s66
      %p77 = scmp.eq.s32.totalorder %s17, 0
      %p78 = por %p76, %p77
      %p79 = scmp.ne.s32.totalorder %s65, %s66
      %p80 = scmp.eq.s32.totalorder %s18, 1
      %p81 = por %p79, %p80
      %p83 = scmp.ne.s32.totalorder %s66, %s82
      %p84 = scmp.eq.s32.totalorder %s18, 0
      %p85 = por %p83, %p84
      %s86 = ssub.s32 %s20, %s27
      %p87 = scmp.eq.s32.totalorder %s86, 0
      %s89 = sadd.s32 %s88, 1
      %s90 = scalar_select %p87, %s88, %s89
      %p93 = pneg %p87
      %p94 = scmp.eq.s32.totalorder %s12, 1
      %p95 = por %p93, %p94
      %p96 = scmp.ne.s32.totalorder %s88, %s91
      %p97 = scmp.eq.s32.totalorder %s12, 0
      %p98 = por %p96, %p97
      %p99 = scmp.ne.s32.totalorder %s88, %s91
      %p100 = scmp.eq.s32.totalorder %s17, 1
      %p101 = por %p99, %p100
      %p102 = scmp.ne.s32.totalorder %s91, %s92
      %p103 = scmp.eq.s32.totalorder %s17, 0
      %p104 = por %p102, %p103
      %p105 = scmp.ne.s32.totalorder %s91, %s92
      %p106 = scmp.eq.s32.totalorder %s18, 1
      %p107 = por %p105, %p106
      %p109 = scmp.ne.s32.totalorder %s92, %s108
      %p110 = scmp.eq.s32.totalorder %s18, 0
      %p111 = por %p109, %p110
      %s112 = ssub.s32 %s19, %s31
      %s113 = ssub.s32 %s20, %s27
      %s114 = sor.u32 %s112, %s113
      %p115 = scmp.eq.s32.totalorder %s114, 0
      %s117 = sadd.s32 %s116, 1
      %s118 = scalar_select %p115, %s116, %s117
      %p121 = pneg %p115
      %p122 = scmp.eq.s32.totalorder %s12, 1
      %p123 = por %p121, %p122
      %p124 = scmp.ne.s32.totalorder %s116, %s119
      %p125 = scmp.eq.s32.totalorder %s12, 0
      %p126 = por %p124, %p125
      %p127 = scmp.ne.s32.totalorder %s116, %s119
      %p128 = scmp.eq.s32.totalorder %s17, 1
      %p129 = por %p127, %p128
      %p130 = scmp.ne.s32.totalorder %s119, %s120
      %p131 = scmp.eq.s32.totalorder %s17, 0
      %p132 = por %p130, %p131
      %p133 = scmp.ne.s32.totalorder %s119, %s120
      %p134 = scmp.eq.s32.totalorder %s18, 1
      %p135 = por %p133, %p134
      %p137 = scmp.ne.s32.totalorder %s120, %s136
      %p138 = scmp.eq.s32.totalorder %s18, 0
      %p139 = por %p137, %p138
      %p140 = scmp.le.s32.totalorder 1, %s12
      %p141 = scmp.lt.s32.totalorder %s12, 3
      %p142 = pnand %p140, %p141
      %p143 = pneg %p142
      // Predicated region
      $region9: #{tpu_custom_call.1} parent=5 // pred_check
        _
      $region10: #{tpu_custom_call.1} parent=5 // pred_check_branch
        %145 = sbr.rel (%p142) target = $region12
      $region11: #{tpu_custom_call.1} parent=5 // pred_region
        %s146 = ssub.s32 %s12, 1
        // Predicated region
        $region13: #{tpu_custom_call.1} parent=11 // pred_check
          %p147 = pneg %p104
        $region14: #{tpu_custom_call.1} parent=11 // pred_check_branch
          %149 = sbr.rel (%p147) target = $region16
        $region15: #{tpu_custom_call.1} parent=11 // pred_region
          %s150 = smul.u32 2, %s22
          %p151 = scmp.lt.s32.totalorder %s150, 1
          %s152 = scalar_select %p151, %s150, 1
          %s153 = smul.addr %s152, 2
          %s154 = scalar_lea.vmem %s2, %s153
          %s155 = smul.u32 2, %s22
        $region16: #{tpu_custom_call.1} parent=11 // pred_fallthru
          _
      $region12: #{tpu_custom_call.1} parent=5 // pred_fallthru
        _
      %p156 = scmp.lt.s32.totalorder %s12, 2
      // Predicated region
      $region17: #{tpu_custom_call.1} parent=5 // pred_check
        %p157 = pneg %p156
      $region18: #{tpu_custom_call.1} parent=5 // pred_check_branch
        %159 = sbr.rel (%p157) target = $region20
      $region19: #{tpu_custom_call.1} parent=5 // pred_region
        // Predicated region
        $region21: #{tpu_custom_call.1} parent=19 // pred_check
          %p160 = pneg %p44
        $region22: #{tpu_custom_call.1} parent=19 // pred_check_branch
          %162 = sbr.rel (%p160) target = $region24
        $region23: #{tpu_custom_call.1} parent=19 // pred_region
          %p163 = scmp.lt.s32.totalorder %s19, 1
          %s164 = scalar_select %p163, %s19, 1
          %s165 = smul.addr %s164, 8
          %s166 = smul.addr %s165, 8
          %s167 = scalar_lea.vmem %s0, %s166
        $region24: #{tpu_custom_call.1} parent=19 // pred_fallthru
          _
        // Predicated region
        $region25: #{tpu_custom_call.1} parent=19 // pred_check
          %p168 = pneg %p72
        $region26: #{tpu_custom_call.1} parent=19 // pred_check_branch
          %170 = sbr.rel (%p168) target = $region28
        $region27: #{tpu_custom_call.1} parent=19 // pred_region
          %s171 = smul.u32 2, %s20
          %p172 = scmp.lt.s32.totalorder %s19, 1
          %s173 = scalar_select %p172, %s19, 1
          %p174 = scmp.lt.s32.totalorder %s171, 1
          %s175 = scalar_select %p174, %s171, 1
          %s176 = smul.addr %s173, 2
          %s177 = sadd.s32 %s175, %s176
          %s178 = smul.addr %s177, 2
          %s179 = scalar_lea.vmem %s1, %s178
          %s180 = smul.u32 2, %s20
        $region28: #{tpu_custom_call.1} parent=19 // pred_fallthru
          _
      $region20: #{tpu_custom_call.1} parent=5 // pred_fallthru
        _
      %p181 = scmp.le.s32.totalorder 1, %s12
      %p182 = scmp.lt.s32.totalorder %s12, 3
      %p183 = pnand %p181, %p182
      %p184 = pneg %p183
      // Predicated region
      $region29: #{tpu_custom_call.1} parent=5 // pred_check
        _
      $region30: #{tpu_custom_call.1} parent=5 // pred_check_branch
        %186 = sbr.rel (%p183) target = $region32
      $region31: #{tpu_custom_call.1} parent=5 // pred_region
        %s187 = ssub.s32 %s12, 1
        %p188 = scmp.lt.s32.totalorder %s21, 1
        %s189 = scalar_select %p188, %s21, 1
        %s190 = smul.addr %s189, 8
        %s191 = smul.addr %s190, 8
        %s192 = scalar_lea.vmem %s0, %s191
        %p193 = pneg %p50
        %p194 = pneg %p47
        %s195 = smul.u32 2, %s22
        %p196 = scmp.lt.s32.totalorder %s21, 1
        %s197 = scalar_select %p196, %s21, 1
        %p198 = scmp.lt.s32.totalorder %s195, 1
        %s199 = scalar_select %p198, %s195, 1
        %s200 = smul.addr %s197, 2
        %s201 = sadd.s32 %s199, %s200
        %s202 = smul.addr %s201, 2
        %s203 = scalar_lea.vmem %s1, %s202
        %p204 = pneg %p78
        %p205 = pneg %p75
        %s206 = smul.u32 2, %s22
        %p207 = scmp.lt.s32.totalorder %s206, 1
        %s208 = scalar_select %p207, %s206, 1
        %s209 = smul.addr %s208, 2
        %s210 = scalar_lea.vmem %s2, %s209
        %p211 = pneg %p104
        %p212 = pneg %p101
        %p213 = pneg %p132
        %p214 = pneg %p129
        %s215 = sand.u32 %s119, 1
        %s216 = scalar_lea.sflag [#allocation3], %s215
        %s217 = sand.u32 %s119, 1
        %s218 = smul.addr %s217, 8
        %s219 = scalar_lea.vmem [#allocation2], %s218
        %p220 = scmp.lt.s32.totalorder %s21, 1
        %s221 = scalar_select %p220, %s21, 1
        %s222 = smul.addr %s221, 8
        %s223 = smul.addr %s222, 8
        %s224 = scalar_lea.vmem %s0, %s223
        %s225 = smul.u32 2, %s22
        %p226 = scmp.lt.s32.totalorder %s21, 1
        %s227 = scalar_select %p226, %s21, 1
        %p228 = scmp.lt.s32.totalorder %s225, 1
        %s229 = scalar_select %p228, %s225, 1
        %s230 = smul.addr %s227, 2
        %s231 = sadd.s32 %s229, %s230
        %s232 = smul.addr %s231, 2
        %s233 = scalar_lea.vmem %s1, %s232
        %s234 = smul.u32 2, %s22
        %s235 = smul.u32 2, %s22
        %p236 = scmp.lt.s32.totalorder %s235, 1
        %s237 = scalar_select %p236, %s235, 1
        %s238 = smul.addr %s237, 2
        %s239 = scalar_lea.vmem %s2, %s238
        %s240 = smul.u32 2, %s22
        %s241 = smul.u32 2, %s22
        %v242 = vld [vmem:[%s224] sm:$0xff]
        %v243 = vld [vmem:[%s224 + $0x8] sm:$0xff]
        %v244 = vld [vmem:[%s224 + $0x10] sm:$0xff]
        %v245 = vld [vmem:[%s224 + $0x18] sm:$0xff]
        %v246 = vld [vmem:[%s224 + $0x20] sm:$0xff]
        %v247 = vld [vmem:[%s224 + $0x28] sm:$0xff]
        %v248 = vld [vmem:[%s224 + $0x30] sm:$0xff]
        %v249 = vld [vmem:[%s224 + $0x38] sm:$0xff]
        %v250 = vld [vmem:[%s233] ss:$2 sm:$0x3]
        %s251 = scalar_lea.vmem %s233, 1
        %v252 = vld [vmem:[%s251] ss:$2 sm:$0x3]
        %v253 = vld [vmem:[%s239] ss:$2 sm:$0x3]
        %s254 = scalar_lea.vmem %s239, 1
        %v255 = vld [vmem:[%s254] ss:$2 sm:$0x3]
        %v256 = vmul.f32 %v253, 2.0
        %v257 = vrcp.pop 15.0
        %v258 = vmul.f32 %v256, %v257
        %v259 = vadd.f32 %v258, -1.0
        %v260 = vmul.f32 %v255, 2.0
        %v261 = vmul.f32 %v260, %v257
        %v262 = vadd.f32 %v261, -1.0
        %v263 = vmul.f32 %v250, 0.13333334
        %v264 = vadd.f32 %v259, %v263
        %v265 = vmul.f32 %v252, 0.13333334
        %v266 = vadd.f32 %v262, %v265
        %v267 = vadd.f32 %v264, 1.0
        %v268 = vmul.f32 %v267, 16.0
        %v269 = vsub.f32 %v268, 1.0
        %v270 = vmul.f32 %v269, 0.5
        %v271 = vadd.f32 %v266, 1.0
        %v272 = vmul.f32 %v271, 16.0
        %v273 = vsub.f32 %v272, 1.0
        %v274 = vmul.f32 %v273, 0.5
        %v275 = vfloor.f32 %v270
        %v276 = vfloor.f32 %v274
        %v277 = vsub.f32 %v270, %v275
        %v278 = vsub.f32 1.0, %v277
        %v279 = vsub.f32 %v274, %v276
        %v280 = vsub.f32 1.0, %v279
        %v281 = vcvt.f32.s32.to.zero.pseudo %v275
        %v282 = vcvt.f32.s32.to.zero.pseudo %v276
        %v283 = vlaneseq
        %v284 = vshrl.u32 %v283, 7
        %v285 = vadd.s32 %v284, 8
        %v286 = vlaneseq
        %v287 = vshrl.u32 %v286, 7
        %v288 = vsub.s32 0, %v287
        %v289 = vrot.slane %v281, %v288
        %v290 = vlaneseq
        %v291 = vshrl.u32 %v290, 7
        %v292 = vsub.s32 1, %v291
        %v293 = vrot.slane %v281, %v292
        %vm294 = vcmp.eq.s32.totalorder %v284, %v289
        %vm295 = vcmp.eq.s32.totalorder %v284, %v293
        %vm296 = vcmp.eq.s32.totalorder %v285, %v289
        %vm297 = vcmp.eq.s32.totalorder %v285, %v293
        %v299 = vlaneseq
        %v300 = vshrl.u32 %v299, 7
        %v301 = vsub.s32 0, %v300
        %v302 = vrot.slane %v278, %v301
        %v303 = vlaneseq
        %v304 = vshrl.u32 %v303, 7
        %v305 = vsub.s32 1, %v304
        %v306 = vrot.slane %v278, %v305
        %v309 = vsel %vm294, %v302, 0.0
        %v310 = vsel %vm295, %v306, 0.0
        %v311 = vsel %vm296, %v302, 0.0
        %v312 = vsel %vm297, %v306, 0.0
        %v313 = vadd.s32 %v281, 1
        %v314 = vlaneseq
        %v315 = vshrl.u32 %v314, 7
        %v316 = vsub.s32 0, %v315
        %v317 = vrot.slane %v313, %v316
        %v318 = vlaneseq
        %v319 = vshrl.u32 %v318, 7
        %v320 = vsub.s32 1, %v319
        %v321 = vrot.slane %v313, %v320
        %vm322 = vcmp.eq.s32.totalorder %v284, %v317
        %vm323 = vcmp.eq.s32.totalorder %v284, %v321
        %vm324 = vcmp.eq.s32.totalorder %v285, %v317
        %vm325 = vcmp.eq.s32.totalorder %v285, %v321
        %v327 = vlaneseq
        %v328 = vshrl.u32 %v327, 7
        %v329 = vsub.s32 0, %v328
        %v330 = vrot.slane %v277, %v329
        %v331 = vlaneseq
        %v332 = vshrl.u32 %v331, 7
        %v333 = vsub.s32 1, %v332
        %v334 = vrot.slane %v277, %v333
        %v337 = vsel %vm322, %v330, 0.0
        %v338 = vsel %vm323, %v334, 0.0
        %v339 = vsel %vm324, %v330, 0.0
        %v340 = vsel %vm325, %v334, 0.0
        %v341 = vadd.f32 %v309, %v337
        %v342 = vadd.f32 %v310, %v338
        %v343 = vadd.f32 %v311, %v339
        %v344 = vadd.f32 %v312, %v340
        %vm345 = vcmask 130048
        %v347 = vsel %vm345, %v242, 0
        %v350 = vsel %vm345, %v243, 0
        %v353 = vsel %vm345, %v244, 0
        %v356 = vsel %vm345, %v245, 0
        %v359 = vsel %vm345, %v246, 0
        %v362 = vsel %vm345, %v247, 0
        %v365 = vsel %vm345, %v248, 0
        %v368 = vsel %vm345, %v249, 0
        %370 = vmatprep.subr.mxu0 0.0
        %371 = vmatpush1.msra.mxu0 0.0
        %372 = vmatprep.subr.mxu0 0.0
        %373 = vmatpush1.msra.mxu0 0.0
        %374 = vmatprep.subr.mxu0 0.0
        %375 = vmatpush1.msra.mxu0 0.0
        %376 = vmatprep.subr.mxu0 0.0
        %377 = vmatpush1.msra.mxu0 0.0
        %378 = vmatprep.subr.mxu0 0.0
        %379 = vmatpush1.msra.mxu0 0.0
        %380 = vmatprep.subr.mxu0 0.0
        %381 = vmatpush1.msra.mxu0 0.0
        %382 = vmatprep.subr.mxu0 0.0
        %383 = vmatpush1.msra.mxu0 0.0
        %384 = vmatprep.subr.mxu0 0.0
        %385 = vmatpush1.msra.mxu0 0.0
        %386 = vmatprep.subr.mxu0 0.0
        %387 = vmatpush1.msra.mxu0 0.0
        %388 = vmatprep.subr.mxu0 0.0
        %389 = vmatpush1.msra.mxu0 0.0
        %390 = vmatprep.subr.mxu0 0.0
        %391 = vmatpush1.msra.mxu0 0.0
        %392 = vmatprep.subr.mxu0 0.0
        %393 = vmatpush1.msra.mxu0 0.0
        %394 = vmatprep.subr.mxu0 0.0
        %395 = vmatpush1.msra.mxu0 0.0
        %396 = vmatprep.subr.mxu0 0.0
        %397 = vmatpush1.msra.mxu0 0.0
        %v398 = vand.u32 %v344, 4294901760
        %399 = vmatprep.subr.mxu0 %v398
        %v400 = vand.u32 %v343, 4294901760
        %401 = vmatpush1.msra.mxu0 %v400
        %v402 = vand.u32 %v342, 4294901760
        %403 = vmatprep.subr.mxu0 %v402
        %v404 = vand.u32 %v341, 4294901760
        %405 = vmatpush1.msra.mxu0 %v404
        %406 = vmatprep.subr.mxu0 0.0
        %407 = vmatpush2.msra.mxu0 0.0
        %408 = vmatprep.subr.mxu0 0.0
        %409 = vmatpush2.msra.mxu0 0.0
        %410 = vmatprep.subr.mxu0 0.0
        %411 = vmatpush2.msra.mxu0 0.0
        %412 = vmatprep.subr.mxu0 0.0
        %413 = vmatpush2.msra.mxu0 0.0
        %414 = vmatprep.subr.mxu0 0.0
        %415 = vmatpush2.msra.mxu0 0.0
        %416 = vmatprep.subr.mxu0 0.0
        %417 = vmatpush2.msra.mxu0 0.0
        %418 = vmatprep.subr.mxu0 0.0
        %419 = vmatpush2.msra.mxu0 0.0
        %420 = vmatprep.subr.mxu0 0.0
        %421 = vmatpush2.msra.mxu0 0.0
        %422 = vmatprep.subr.mxu0 0.0
        %423 = vmatpush2.msra.mxu0 0.0
        %424 = vmatprep.subr.mxu0 0.0
        %425 = vmatpush2.msra.mxu0 0.0
        %426 = vmatprep.subr.mxu0 0.0
        %427 = vmatpush2.msra.mxu0 0.0
        %428 = vmatprep.subr.mxu0 0.0
        %429 = vmatpush2.msra.mxu0 0.0
        %430 = vmatprep.subr.mxu0 0.0
        %431 = vmatpush2.msra.mxu0 0.0
        %432 = vmatprep.subr.mxu0 0.0
        %433 = vmatpush2.msra.mxu0 0.0
        %434 = vmatprep.subr.mxu0 0.0
        %435 = vmatpush2.msra.mxu0 0.0
        %436 = vmatprep.subr.mxu0 0.0
        %437 = vmatpush2.msra.mxu0 0.0
        %438 = vmatprep.mubr.f32.mxu0 0.0
        %v439 = vand.u32 %v347, 4294901760
        %v440 = vsub.f32 %v347, %v439
        %v441 = vand.u32 %v440, 4294901760
        %v442 = vsub.f32 %v440, %v441
        %v443 = vand.u32 %v442, 4294901760
        %444 = vmatmul.mubr.f32.gmra.mxu0 %v443
        %v445 = vpop.f32.mrf.mxu0
        %v446 = vadd.f32 0.0, %v445
        %v447 = vpop.f32.mrf.mxu0
        %v448 = vadd.f32 0.0, %v447
        %449 = vmatprep.mubr.f32.mxu0 0.0
        %v450 = vand.u32 %v350, 4294901760
        %v451 = vsub.f32 %v350, %v450
        %v452 = vand.u32 %v451, 4294901760
        %v453 = vsub.f32 %v451, %v452
        %v454 = vand.u32 %v453, 4294901760
        %455 = vmatmul.mubr.f32.gmra.mxu0 %v454
        %v456 = vpop.f32.mrf.mxu0
        %v457 = vadd.f32 0.0, %v456
        %v458 = vpop.f32.mrf.mxu0
        %v459 = vadd.f32 0.0, %v458
        %460 = vmatprep.mubr.f32.mxu0 0.0
        %v461 = vand.u32 %v353, 4294901760
        %v462 = vsub.f32 %v353, %v461
        %v463 = vand.u32 %v462, 4294901760
        %v464 = vsub.f32 %v462, %v463
        %v465 = vand.u32 %v464, 4294901760
        %466 = vmatmul.mubr.f32.gmra.mxu0 %v465
        %v467 = vpop.f32.mrf.mxu0
        %v468 = vadd.f32 0.0, %v467
        %v469 = vpop.f32.mrf.mxu0
        %v470 = vadd.f32 0.0, %v469
        %471 = vmatprep.mubr.f32.mxu0 0.0
        %v472 = vand.u32 %v356, 4294901760
        %v473 = vsub.f32 %v356, %v472
        %v474 = vand.u32 %v473, 4294901760
        %v475 = vsub.f32 %v473, %v474
        %v476 = vand.u32 %v475, 4294901760
        %477 = vmatmul.mubr.f32.gmra.mxu0 %v476
        %v478 = vpop.f32.mrf.mxu0
        %v479 = vadd.f32 0.0, %v478
        %v480 = vpop.f32.mrf.mxu0
        %v481 = vadd.f32 0.0, %v480
        %482 = vmatprep.mubr.f32.mxu0 0.0
        %v483 = vand.u32 %v359, 4294901760
        %v484 = vsub.f32 %v359, %v483
        %v485 = vand.u32 %v484, 4294901760
        %v486 = vsub.f32 %v484, %v485
        %v487 = vand.u32 %v486, 4294901760
        %488 = vmatmul.mubr.f32.gmra.mxu0 %v487
        %v489 = vpop.f32.mrf.mxu0
        %v490 = vadd.f32 0.0, %v489
        %v491 = vpop.f32.mrf.mxu0
        %v492 = vadd.f32 0.0, %v491
        %493 = vmatprep.mubr.f32.mxu0 0.0
        %v494 = vand.u32 %v362, 4294901760
        %v495 = vsub.f32 %v362, %v494
        %v496 = vand.u32 %v495, 4294901760
        %v497 = vsub.f32 %v495, %v496
        %v498 = vand.u32 %v497, 4294901760
        %499 = vmatmul.mubr.f32.gmra.mxu0 %v498
        %v500 = vpop.f32.mrf.mxu0
        %v501 = vadd.f32 0.0, %v500
        %v502 = vpop.f32.mrf.mxu0
        %v503 = vadd.f32 0.0, %v502
        %504 = vmatprep.mubr.f32.mxu0 0.0
        %v505 = vand.u32 %v365, 4294901760
        %v506 = vsub.f32 %v365, %v505
        %v507 = vand.u32 %v506, 4294901760
        %v508 = vsub.f32 %v506, %v507
        %v509 = vand.u32 %v508, 4294901760
        %510 = vmatmul.mubr.f32.gmra.mxu0 %v509
        %v511 = vpop.f32.mrf.mxu0
        %v512 = vadd.f32 0.0, %v511
        %v513 = vpop.f32.mrf.mxu0
        %v514 = vadd.f32 0.0, %v513
        %515 = vmatprep.mubr.f32.mxu0 0.0
        %v516 = vand.u32 %v368, 4294901760
        %v517 = vsub.f32 %v368, %v516
        %v518 = vand.u32 %v517, 4294901760
        %v519 = vsub.f32 %v517, %v518
        %v520 = vand.u32 %v519, 4294901760
        %521 = vmatmul.mubr.f32.gmra.mxu0 %v520
        %v522 = vpop.f32.mrf.mxu0
        %v523 = vadd.f32 0.0, %v522
        %v524 = vpop.f32.mrf.mxu0
        %v525 = vadd.f32 0.0, %v524
        %526 = vdwg.mxu0
        %527 = vmatprep.subr.mxu0 0.0
        %528 = vmatpush1.msra.mxu0 0.0
        %529 = vmatprep.subr.mxu0 0.0
        %530 = vmatpush1.msra.mxu0 0.0
        %531 = vmatprep.subr.mxu0 0.0
        %532 = vmatpush1.msra.mxu0 0.0
        %533 = vmatprep.subr.mxu0 0.0
        %534 = vmatpush1.msra.mxu0 0.0
        %535 = vmatprep.subr.mxu0 0.0
        %536 = vmatpush1.msra.mxu0 0.0
        %537 = vmatprep.subr.mxu0 0.0
        %538 = vmatpush1.msra.mxu0 0.0
        %539 = vmatprep.subr.mxu0 0.0
        %540 = vmatpush1.msra.mxu0 0.0
        %541 = vmatprep.subr.mxu0 0.0
        %542 = vmatpush1.msra.mxu0 0.0
        %543 = vmatprep.subr.mxu0 0.0
        %544 = vmatpush1.msra.mxu0 0.0
        %545 = vmatprep.subr.mxu0 0.0
        %546 = vmatpush1.msra.mxu0 0.0
        %547 = vmatprep.subr.mxu0 0.0
        %548 = vmatpush1.msra.mxu0 0.0
        %549 = vmatprep.subr.mxu0 0.0
        %550 = vmatpush1.msra.mxu0 0.0
        %551 = vmatprep.subr.mxu0 0.0
        %552 = vmatpush1.msra.mxu0 0.0
        %553 = vmatprep.subr.mxu0 0.0
        %554 = vmatpush1.msra.mxu0 0.0
        %v555 = vand.u32 %v344, 4294901760
        %v556 = vsub.f32 %v344, %v555
        %v557 = vand.u32 %v556, 4294901760
        %v558 = vsub.f32 %v556, %v557
        %v559 = vand.u32 %v558, 4294901760
        %560 = vmatprep.subr.mxu0 %v559
        %v561 = vand.u32 %v343, 4294901760
        %v562 = vsub.f32 %v343, %v561
        %v563 = vand.u32 %v562, 4294901760
        %v564 = vsub.f32 %v562, %v563
        %v565 = vand.u32 %v564, 4294901760
        %566 = vmatpush1.msra.mxu0 %v565
        %v567 = vand.u32 %v342, 4294901760
        %v568 = vsub.f32 %v342, %v567
        %v569 = vand.u32 %v568, 4294901760
        %v570 = vsub.f32 %v568, %v569
        %v571 = vand.u32 %v570, 4294901760
        %572 = vmatprep.subr.mxu0 %v571
        %v573 = vand.u32 %v341, 4294901760
        %v574 = vsub.f32 %v341, %v573
        %v575 = vand.u32 %v574, 4294901760
        %v576 = vsub.f32 %v574, %v575
        %v577 = vand.u32 %v576, 4294901760
        %578 = vmatpush1.msra.mxu0 %v577
        %579 = vmatprep.subr.mxu0 0.0
        %580 = vmatpush2.msra.mxu0 0.0
        %581 = vmatprep.subr.mxu0 0.0
        %582 = vmatpush2.msra.mxu0 0.0
        %583 = vmatprep.subr.mxu0 0.0
        %584 = vmatpush2.msra.mxu0 0.0
        %585 = vmatprep.subr.mxu0 0.0
        %586 = vmatpush2.msra.mxu0 0.0
        %587 = vmatprep.subr.mxu0 0.0
        %588 = vmatpush2.msra.mxu0 0.0
        %589 = vmatprep.subr.mxu0 0.0
        %590 = vmatpush2.msra.mxu0 0.0
        %591 = vmatprep.subr.mxu0 0.0
        %592 = vmatpush2.msra.mxu0 0.0
        %593 = vmatprep.subr.mxu0 0.0
        %594 = vmatpush2.msra.mxu0 0.0
        %595 = vmatprep.subr.mxu0 0.0
        %596 = vmatpush2.msra.mxu0 0.0
        %597 = vmatprep.subr.mxu0 0.0
        %598 = vmatpush2.msra.mxu0 0.0
        %599 = vmatprep.subr.mxu0 0.0
        %600 = vmatpush2.msra.mxu0 0.0
        %601 = vmatprep.subr.mxu0 0.0
        %602 = vmatpush2.msra.mxu0 0.0
        %603 = vmatprep.subr.mxu0 0.0
        %604 = vmatpush2.msra.mxu0 0.0
        %605 = vmatprep.subr.mxu0 0.0
        %606 = vmatpush2.msra.mxu0 0.0
        %607 = vmatprep.subr.mxu0 0.0
        %608 = vmatpush2.msra.mxu0 0.0
        %609 = vmatprep.subr.mxu0 0.0
        %610 = vmatpush2.msra.mxu0 0.0
        %611 = vmatprep.mubr.f32.mxu0 0.0
        %v612 = vand.u32 %v347, 4294901760
        %613 = vmatmul.mubr.f32.gmra.mxu0 %v612
        %v614 = vpop.f32.mrf.mxu0
        %v615 = vadd.f32 %v446, %v614
        %v616 = vpop.f32.mrf.mxu0
        %v617 = vadd.f32 %v448, %v616
        %618 = vmatprep.mubr.f32.mxu0 0.0
        %v619 = vand.u32 %v350, 4294901760
        %620 = vmatmul.mubr.f32.gmra.mxu0 %v619
        %v621 = vpop.f32.mrf.mxu0
        %v622 = vadd.f32 %v457, %v621
        %v623 = vpop.f32.mrf.mxu0
        %v624 = vadd.f32 %v459, %v623
        %625 = vmatprep.mubr.f32.mxu0 0.0
        %v626 = vand.u32 %v353, 4294901760
        %627 = vmatmul.mubr.f32.gmra.mxu0 %v626
        %v628 = vpop.f32.mrf.mxu0
        %v629 = vadd.f32 %v468, %v628
        %v630 = vpop.f32.mrf.mxu0
        %v631 = vadd.f32 %v470, %v630
        %632 = vmatprep.mubr.f32.mxu0 0.0
        %v633 = vand.u32 %v356, 4294901760
        %634 = vmatmul.mubr.f32.gmra.mxu0 %v633
        %v635 = vpop.f32.mrf.mxu0
        %v636 = vadd.f32 %v479, %v635
        %v637 = vpop.f32.mrf.mxu0
        %v638 = vadd.f32 %v481, %v637
        %639 = vmatprep.mubr.f32.mxu0 0.0
        %v640 = vand.u32 %v359, 4294901760
        %641 = vmatmul.mubr.f32.gmra.mxu0 %v640
        %v642 = vpop.f32.mrf.mxu0
        %v643 = vadd.f32 %v490, %v642
        %v644 = vpop.f32.mrf.mxu0
        %v645 = vadd.f32 %v492, %v644
        %646 = vmatprep.mubr.f32.mxu0 0.0
        %v647 = vand.u32 %v362, 4294901760
        %648 = vmatmul.mubr.f32.gmra.mxu0 %v647
        %v649 = vpop.f32.mrf.mxu0
        %v650 = vadd.f32 %v501, %v649
        %v651 = vpop.f32.mrf.mxu0
        %v652 = vadd.f32 %v503, %v651
        %653 = vmatprep.mubr.f32.mxu0 0.0
        %v654 = vand.u32 %v365, 4294901760
        %655 = vmatmul.mubr.f32.gmra.mxu0 %v654
        %v656 = vpop.f32.mrf.mxu0
        %v657 = vadd.f32 %v512, %v656
        %v658 = vpop.f32.mrf.mxu0
        %v659 = vadd.f32 %v514, %v658
        %660 = vmatprep.mubr.f32.mxu0 0.0
        %v661 = vand.u32 %v368, 4294901760
        %662 = vmatmul.mubr.f32.gmra.mxu0 %v661
        %v663 = vpop.f32.mrf.mxu0
        %v664 = vadd.f32 %v523, %v663
        %v665 = vpop.f32.mrf.mxu0
        %v666 = vadd.f32 %v525, %v665
        %667 = vdwg.mxu0
        %668 = vmatprep.subr.mxu0 0.0
        %669 = vmatpush1.msra.mxu0 0.0
        %670 = vmatprep.subr.mxu0 0.0
        %671 = vmatpush1.msra.mxu0 0.0
        %672 = vmatprep.subr.mxu0 0.0
        %673 = vmatpush1.msra.mxu0 0.0
        %674 = vmatprep.subr.mxu0 0.0
        %675 = vmatpush1.msra.mxu0 0.0
        %676 = vmatprep.subr.mxu0 0.0
        %677 = vmatpush1.msra.mxu0 0.0
        %678 = vmatprep.subr.mxu0 0.0
        %679 = vmatpush1.msra.mxu0 0.0
        %680 = vmatprep.subr.mxu0 0.0
        %681 = vmatpush1.msra.mxu0 0.0
        %682 = vmatprep.subr.mxu0 0.0
        %683 = vmatpush1.msra.mxu0 0.0
        %684 = vmatprep.subr.mxu0 0.0
        %685 = vmatpush1.msra.mxu0 0.0
        %686 = vmatprep.subr.mxu0 0.0
        %687 = vmatpush1.msra.mxu0 0.0
        %688 = vmatprep.subr.mxu0 0.0
        %689 = vmatpush1.msra.mxu0 0.0
        %690 = vmatprep.subr.mxu0 0.0
        %691 = vmatpush1.msra.mxu0 0.0
        %692 = vmatprep.subr.mxu0 0.0
        %693 = vmatpush1.msra.mxu0 0.0
        %694 = vmatprep.subr.mxu0 0.0
        %695 = vmatpush1.msra.mxu0 0.0
        %v696 = vand.u32 %v344, 4294901760
        %v697 = vsub.f32 %v344, %v696
        %698 = vmatprep.subr.mxu0 %v697
        %v699 = vand.u32 %v343, 4294901760
        %v700 = vsub.f32 %v343, %v699
        %701 = vmatpush1.msra.mxu0 %v700
        %v702 = vand.u32 %v342, 4294901760
        %v703 = vsub.f32 %v342, %v702
        %704 = vmatprep.subr.mxu0 %v703
        %v705 = vand.u32 %v341, 4294901760
        %v706 = vsub.f32 %v341, %v705
        %707 = vmatpush1.msra.mxu0 %v706
        %708 = vmatprep.subr.mxu0 0.0
        %709 = vmatpush2.msra.mxu0 0.0
        %710 = vmatprep.subr.mxu0 0.0
        %711 = vmatpush2.msra.mxu0 0.0
        %712 = vmatprep.subr.mxu0 0.0
        %713 = vmatpush2.msra.mxu0 0.0
        %714 = vmatprep.subr.mxu0 0.0
        %715 = vmatpush2.msra.mxu0 0.0
        %716 = vmatprep.subr.mxu0 0.0
        %717 = vmatpush2.msra.mxu0 0.0
        %718 = vmatprep.subr.mxu0 0.0
        %719 = vmatpush2.msra.mxu0 0.0
        %720 = vmatprep.subr.mxu0 0.0
        %721 = vmatpush2.msra.mxu0 0.0
        %722 = vmatprep.subr.mxu0 0.0
        %723 = vmatpush2.msra.mxu0 0.0
        %724 = vmatprep.subr.mxu0 0.0
        %725 = vmatpush2.msra.mxu0 0.0
        %726 = vmatprep.subr.mxu0 0.0
        %727 = vmatpush2.msra.mxu0 0.0
        %728 = vmatprep.subr.mxu0 0.0
        %729 = vmatpush2.msra.mxu0 0.0
        %730 = vmatprep.subr.mxu0 0.0
        %731 = vmatpush2.msra.mxu0 0.0
        %732 = vmatprep.subr.mxu0 0.0
        %733 = vmatpush2.msra.mxu0 0.0
        %734 = vmatprep.subr.mxu0 0.0
        %735 = vmatpush2.msra.mxu0 0.0
        %736 = vmatprep.subr.mxu0 0.0
        %737 = vmatpush2.msra.mxu0 0.0
        %738 = vmatprep.subr.mxu0 0.0
        %739 = vmatpush2.msra.mxu0 0.0
        %740 = vmatprep.mubr.f32.mxu0 0.0
        %v741 = vand.u32 %v347, 4294901760
        %v742 = vsub.f32 %v347, %v741
        %743 = vmatmul.mubr.f32.gmra.mxu0 %v742
        %v744 = vpop.f32.mrf.mxu0
        %v745 = vadd.f32 %v615, %v744
        %v746 = vpop.f32.mrf.mxu0
        %v747 = vadd.f32 %v617, %v746
        %748 = vmatprep.mubr.f32.mxu0 0.0
        %v749 = vand.u32 %v350, 4294901760
        %v750 = vsub.f32 %v350, %v749
        %751 = vmatmul.mubr.f32.gmra.mxu0 %v750
        %v752 = vpop.f32.mrf.mxu0
        %v753 = vadd.f32 %v622, %v752
        %v754 = vpop.f32.mrf.mxu0
        %v755 = vadd.f32 %v624, %v754
        %756 = vmatprep.mubr.f32.mxu0 0.0
        %v757 = vand.u32 %v353, 4294901760
        %v758 = vsub.f32 %v353, %v757
        %759 = vmatmul.mubr.f32.gmra.mxu0 %v758
        %v760 = vpop.f32.mrf.mxu0
        %v761 = vadd.f32 %v629, %v760
        %v762 = vpop.f32.mrf.mxu0
        %v763 = vadd.f32 %v631, %v762
        %764 = vmatprep.mubr.f32.mxu0 0.0
        %v765 = vand.u32 %v356, 4294901760
        %v766 = vsub.f32 %v356, %v765
        %767 = vmatmul.mubr.f32.gmra.mxu0 %v766
        %v768 = vpop.f32.mrf.mxu0
        %v769 = vadd.f32 %v636, %v768
        %v770 = vpop.f32.mrf.mxu0
        %v771 = vadd.f32 %v638, %v770
        %772 = vmatprep.mubr.f32.mxu0 0.0
        %v773 = vand.u32 %v359, 4294901760
        %v774 = vsub.f32 %v359, %v773
        %775 = vmatmul.mubr.f32.gmra.mxu0 %v774
        %v776 = vpop.f32.mrf.mxu0
        %v777 = vadd.f32 %v643, %v776
        %v778 = vpop.f32.mrf.mxu0
        %v779 = vadd.f32 %v645, %v778
        %780 = vmatprep.mubr.f32.mxu0 0.0
        %v781 = vand.u32 %v362, 4294901760
        %v782 = vsub.f32 %v362, %v781
        %783 = vmatmul.mubr.f32.gmra.mxu0 %v782
        %v784 = vpop.f32.mrf.mxu0
        %v785 = vadd.f32 %v650, %v784
        %v786 = vpop.f32.mrf.mxu0
        %v787 = vadd.f32 %v652, %v786
        %788 = vmatprep.mubr.f32.mxu0 0.0
        %v789 = vand.u32 %v365, 4294901760
        %v790 = vsub.f32 %v365, %v789
        %791 = vmatmul.mubr.f32.gmra.mxu0 %v790
        %v792 = vpop.f32.mrf.mxu0
        %v793 = vadd.f32 %v657, %v792
        %v794 = vpop.f32.mrf.mxu0
        %v795 = vadd.f32 %v659, %v794
        %796 = vmatprep.mubr.f32.mxu0 0.0
        %v797 = vand.u32 %v368, 4294901760
        %v798 = vsub.f32 %v368, %v797
        %799 = vmatmul.mubr.f32.gmra.mxu0 %v798
        %v800 = vpop.f32.mrf.mxu0
        %v801 = vadd.f32 %v664, %v800
        %v802 = vpop.f32.mrf.mxu0
        %v803 = vadd.f32 %v666, %v802
        %804 = vdwg.mxu0
        %805 = vmatprep.subr.mxu0 0.0
        %806 = vmatpush1.msra.mxu0 0.0
        %807 = vmatprep.subr.mxu0 0.0
        %808 = vmatpush1.msra.mxu0 0.0
        %809 = vmatprep.subr.mxu0 0.0
        %810 = vmatpush1.msra.mxu0 0.0
        %811 = vmatprep.subr.mxu0 0.0
        %812 = vmatpush1.msra.mxu0 0.0
        %813 = vmatprep.subr.mxu0 0.0
        %814 = vmatpush1.msra.mxu0 0.0
        %815 = vmatprep.subr.mxu0 0.0
        %816 = vmatpush1.msra.mxu0 0.0
        %817 = vmatprep.subr.mxu0 0.0
        %818 = vmatpush1.msra.mxu0 0.0
        %819 = vmatprep.subr.mxu0 0.0
        %820 = vmatpush1.msra.mxu0 0.0
        %821 = vmatprep.subr.mxu0 0.0
        %822 = vmatpush1.msra.mxu0 0.0
        %823 = vmatprep.subr.mxu0 0.0
        %824 = vmatpush1.msra.mxu0 0.0
        %825 = vmatprep.subr.mxu0 0.0
        %826 = vmatpush1.msra.mxu0 0.0
        %827 = vmatprep.subr.mxu0 0.0
        %828 = vmatpush1.msra.mxu0 0.0
        %829 = vmatprep.subr.mxu0 0.0
        %830 = vmatpush1.msra.mxu0 0.0
        %831 = vmatprep.subr.mxu0 0.0
        %832 = vmatpush1.msra.mxu0 0.0
        %v833 = vand.u32 %v344, 4294901760
        %834 = vmatprep.subr.mxu0 %v833
        %v835 = vand.u32 %v343, 4294901760
        %836 = vmatpush1.msra.mxu0 %v835
        %v837 = vand.u32 %v342, 4294901760
        %838 = vmatprep.subr.mxu0 %v837
        %v839 = vand.u32 %v341, 4294901760
        %840 = vmatpush1.msra.mxu0 %v839
        %841 = vmatprep.subr.mxu0 0.0
        %842 = vmatpush2.msra.mxu0 0.0
        %843 = vmatprep.subr.mxu0 0.0
        %844 = vmatpush2.msra.mxu0 0.0
        %845 = vmatprep.subr.mxu0 0.0
        %846 = vmatpush2.msra.mxu0 0.0
        %847 = vmatprep.subr.mxu0 0.0
        %848 = vmatpush2.msra.mxu0 0.0
        %849 = vmatprep.subr.mxu0 0.0
        %850 = vmatpush2.msra.mxu0 0.0
        %851 = vmatprep.subr.mxu0 0.0
        %852 = vmatpush2.msra.mxu0 0.0
        %853 = vmatprep.subr.mxu0 0.0
        %854 = vmatpush2.msra.mxu0 0.0
        %855 = vmatprep.subr.mxu0 0.0
        %856 = vmatpush2.msra.mxu0 0.0
        %857 = vmatprep.subr.mxu0 0.0
        %858 = vmatpush2.msra.mxu0 0.0
        %859 = vmatprep.subr.mxu0 0.0
        %860 = vmatpush2.msra.mxu0 0.0
        %861 = vmatprep.subr.mxu0 0.0
        %862 = vmatpush2.msra.mxu0 0.0
        %863 = vmatprep.subr.mxu0 0.0
        %864 = vmatpush2.msra.mxu0 0.0
        %865 = vmatprep.subr.mxu0 0.0
        %866 = vmatpush2.msra.mxu0 0.0
        %867 = vmatprep.subr.mxu0 0.0
        %868 = vmatpush2.msra.mxu0 0.0
        %869 = vmatprep.subr.mxu0 0.0
        %870 = vmatpush2.msra.mxu0 0.0
        %871 = vmatprep.subr.mxu0 0.0
        %872 = vmatpush2.msra.mxu0 0.0
        %873 = vmatprep.mubr.f32.mxu0 0.0
        %v874 = vand.u32 %v347, 4294901760
        %v875 = vsub.f32 %v347, %v874
        %v876 = vand.u32 %v875, 4294901760
        %877 = vmatmul.mubr.f32.gmra.mxu0 %v876
        %v878 = vpop.f32.mrf.mxu0
        %v879 = vadd.f32 %v745, %v878
        %v880 = vpop.f32.mrf.mxu0
        %v881 = vadd.f32 %v747, %v880
        %882 = vmatprep.mubr.f32.mxu0 0.0
        %v883 = vand.u32 %v350, 4294901760
        %v884 = vsub.f32 %v350, %v883
        %v885 = vand.u32 %v884, 4294901760
        %886 = vmatmul.mubr.f32.gmra.mxu0 %v885
        %v887 = vpop.f32.mrf.mxu0
        %v888 = vadd.f32 %v753, %v887
        %v889 = vpop.f32.mrf.mxu0
        %v890 = vadd.f32 %v755, %v889
        %891 = vmatprep.mubr.f32.mxu0 0.0
        %v892 = vand.u32 %v353, 4294901760
        %v893 = vsub.f32 %v353, %v892
        %v894 = vand.u32 %v893, 4294901760
        %895 = vmatmul.mubr.f32.gmra.mxu0 %v894
        %v896 = vpop.f32.mrf.mxu0
        %v897 = vadd.f32 %v761, %v896
        %v898 = vpop.f32.mrf.mxu0
        %v899 = vadd.f32 %v763, %v898
        %900 = vmatprep.mubr.f32.mxu0 0.0
        %v901 = vand.u32 %v356, 4294901760
        %v902 = vsub.f32 %v356, %v901
        %v903 = vand.u32 %v902, 4294901760
        %904 = vmatmul.mubr.f32.gmra.mxu0 %v903
        %v905 = vpop.f32.mrf.mxu0
        %v906 = vadd.f32 %v769, %v905
        %v907 = vpop.f32.mrf.mxu0
        %v908 = vadd.f32 %v771, %v907
        %909 = vmatprep.mubr.f32.mxu0 0.0
        %v910 = vand.u32 %v359, 4294901760
        %v911 = vsub.f32 %v359, %v910
        %v912 = vand.u32 %v911, 4294901760
        %913 = vmatmul.mubr.f32.gmra.mxu0 %v912
        %v914 = vpop.f32.mrf.mxu0
        %v915 = vadd.f32 %v777, %v914
        %v916 = vpop.f32.mrf.mxu0
        %v917 = vadd.f32 %v779, %v916
        %918 = vmatprep.mubr.f32.mxu0 0.0
        %v919 = vand.u32 %v362, 4294901760
        %v920 = vsub.f32 %v362, %v919
        %v921 = vand.u32 %v920, 4294901760
        %922 = vmatmul.mubr.f32.gmra.mxu0 %v921
        %v923 = vpop.f32.mrf.mxu0
        %v924 = vadd.f32 %v785, %v923
        %v925 = vpop.f32.mrf.mxu0
        %v926 = vadd.f32 %v787, %v925
        %927 = vmatprep.mubr.f32.mxu0 0.0
        %v928 = vand.u32 %v365, 4294901760
        %v929 = vsub.f32 %v365, %v928
        %v930 = vand.u32 %v929, 4294901760
        %931 = vmatmul.mubr.f32.gmra.mxu0 %v930
        %v932 = vpop.f32.mrf.mxu0
        %v933 = vadd.f32 %v793, %v932
        %v934 = vpop.f32.mrf.mxu0
        %v935 = vadd.f32 %v795, %v934
        %936 = vmatprep.mubr.f32.mxu0 0.0
        %v937 = vand.u32 %v368, 4294901760
        %v938 = vsub.f32 %v368, %v937
        %v939 = vand.u32 %v938, 4294901760
        %940 = vmatmul.mubr.f32.gmra.mxu0 %v939
        %v941 = vpop.f32.mrf.mxu0
        %v942 = vadd.f32 %v801, %v941
        %v943 = vpop.f32.mrf.mxu0
        %v944 = vadd.f32 %v803, %v943
        %945 = vdwg.mxu0
        %946 = vmatprep.subr.mxu0 0.0
        %947 = vmatpush1.msra.mxu0 0.0
        %948 = vmatprep.subr.mxu0 0.0
        %949 = vmatpush1.msra.mxu0 0.0
        %950 = vmatprep.subr.mxu0 0.0
        %951 = vmatpush1.msra.mxu0 0.0
        %952 = vmatprep.subr.mxu0 0.0
        %953 = vmatpush1.msra.mxu0 0.0
        %954 = vmatprep.subr.mxu0 0.0
        %955 = vmatpush1.msra.mxu0 0.0
        %956 = vmatprep.subr.mxu0 0.0
        %957 = vmatpush1.msra.mxu0 0.0
        %958 = vmatprep.subr.mxu0 0.0
        %959 = vmatpush1.msra.mxu0 0.0
        %960 = vmatprep.subr.mxu0 0.0
        %961 = vmatpush1.msra.mxu0 0.0
        %962 = vmatprep.subr.mxu0 0.0
        %963 = vmatpush1.msra.mxu0 0.0
        %964 = vmatprep.subr.mxu0 0.0
        %965 = vmatpush1.msra.mxu0 0.0
        %966 = vmatprep.subr.mxu0 0.0
        %967 = vmatpush1.msra.mxu0 0.0
        %968 = vmatprep.subr.mxu0 0.0
        %969 = vmatpush1.msra.mxu0 0.0
        %970 = vmatprep.subr.mxu0 0.0
        %971 = vmatpush1.msra.mxu0 0.0
        %972 = vmatprep.subr.mxu0 0.0
        %973 = vmatpush1.msra.mxu0 0.0
        %v974 = vand.u32 %v344, 4294901760
        %v975 = vsub.f32 %v344, %v974
        %v976 = vand.u32 %v975, 4294901760
        %977 = vmatprep.subr.mxu0 %v976
        %v978 = vand.u32 %v343, 4294901760
        %v979 = vsub.f32 %v343, %v978
        %v980 = vand.u32 %v979, 4294901760
        %981 = vmatpush1.msra.mxu0 %v980
        %v982 = vand.u32 %v342, 4294901760
        %v983 = vsub.f32 %v342, %v982
        %v984 = vand.u32 %v983, 4294901760
        %985 = vmatprep.subr.mxu0 %v984
        %v986 = vand.u32 %v341, 4294901760
        %v987 = vsub.f32 %v341, %v986
        %v988 = vand.u32 %v987, 4294901760
        %989 = vmatpush1.msra.mxu0 %v988
        %990 = vmatprep.subr.mxu0 0.0
        %991 = vmatpush2.msra.mxu0 0.0
        %992 = vmatprep.subr.mxu0 0.0
        %993 = vmatpush2.msra.mxu0 0.0
        %994 = vmatprep.subr.mxu0 0.0
        %995 = vmatpush2.msra.mxu0 0.0
        %996 = vmatprep.subr.mxu0 0.0
        %997 = vmatpush2.msra.mxu0 0.0
        %998 = vmatprep.subr.mxu0 0.0
        %999 = vmatpush2.msra.mxu0 0.0
        %1000 = vmatprep.subr.mxu0 0.0
        %1001 = vmatpush2.msra.mxu0 0.0
        %1002 = vmatprep.subr.mxu0 0.0
        %1003 = vmatpush2.msra.mxu0 0.0
        %1004 = vmatprep.subr.mxu0 0.0
        %1005 = vmatpush2.msra.mxu0 0.0
        %1006 = vmatprep.subr.mxu0 0.0
        %1007 = vmatpush2.msra.mxu0 0.0
        %1008 = vmatprep.subr.mxu0 0.0
        %1009 = vmatpush2.msra.mxu0 0.0
        %1010 = vmatprep.subr.mxu0 0.0
        %1011 = vmatpush2.msra.mxu0 0.0
        %1012 = vmatprep.subr.mxu0 0.0
        %1013 = vmatpush2.msra.mxu0 0.0
        %1014 = vmatprep.subr.mxu0 0.0
        %1015 = vmatpush2.msra.mxu0 0.0
        %1016 = vmatprep.subr.mxu0 0.0
        %1017 = vmatpush2.msra.mxu0 0.0
        %1018 = vmatprep.subr.mxu0 0.0
        %1019 = vmatpush2.msra.mxu0 0.0
        %1020 = vmatprep.subr.mxu0 0.0
        %1021 = vmatpush2.msra.mxu0 0.0
        %1022 = vmatprep.mubr.f32.mxu0 0.0
        %v1023 = vand.u32 %v347, 4294901760
        %1024 = vmatmul.mubr.f32.gmra.mxu0 %v1023
        %v1025 = vpop.f32.mrf.mxu0
        %v1026 = vadd.f32 %v879, %v1025
        %v1027 = vpop.f32.mrf.mxu0
        %v1028 = vadd.f32 %v881, %v1027
        %1029 = vmatprep.mubr.f32.mxu0 0.0
        %v1030 = vand.u32 %v350, 4294901760
        %1031 = vmatmul.mubr.f32.gmra.mxu0 %v1030
        %v1032 = vpop.f32.mrf.mxu0
        %v1033 = vadd.f32 %v888, %v1032
        %v1034 = vpop.f32.mrf.mxu0
        %v1035 = vadd.f32 %v890, %v1034
        %1036 = vmatprep.mubr.f32.mxu0 0.0
        %v1037 = vand.u32 %v353, 4294901760
        %1038 = vmatmul.mubr.f32.gmra.mxu0 %v1037
        %v1039 = vpop.f32.mrf.mxu0
        %v1040 = vadd.f32 %v897, %v1039
        %v1041 = vpop.f32.mrf.mxu0
        %v1042 = vadd.f32 %v899, %v1041
        %1043 = vmatprep.mubr.f32.mxu0 0.0
        %v1044 = vand.u32 %v356, 4294901760
        %1045 = vmatmul.mubr.f32.gmra.mxu0 %v1044
        %v1046 = vpop.f32.mrf.mxu0
        %v1047 = vadd.f32 %v906, %v1046
        %v1048 = vpop.f32.mrf.mxu0
        %v1049 = vadd.f32 %v908, %v1048
        %1050 = vmatprep.mubr.f32.mxu0 0.0
        %v1051 = vand.u32 %v359, 4294901760
        %1052 = vmatmul.mubr.f32.gmra.mxu0 %v1051
        %v1053 = vpop.f32.mrf.mxu0
        %v1054 = vadd.f32 %v915, %v1053
        %v1055 = vpop.f32.mrf.mxu0
        %v1056 = vadd.f32 %v917, %v1055
        %1057 = vmatprep.mubr.f32.mxu0 0.0
        %v1058 = vand.u32 %v362, 4294901760
        %1059 = vmatmul.mubr.f32.gmra.mxu0 %v1058
        %v1060 = vpop.f32.mrf.mxu0
        %v1061 = vadd.f32 %v924, %v1060
        %v1062 = vpop.f32.mrf.mxu0
        %v1063 = vadd.f32 %v926, %v1062
        %1064 = vmatprep.mubr.f32.mxu0 0.0
        %v1065 = vand.u32 %v365, 4294901760
        %1066 = vmatmul.mubr.f32.gmra.mxu0 %v1065
        %v1067 = vpop.f32.mrf.mxu0
        %v1068 = vadd.f32 %v933, %v1067
        %v1069 = vpop.f32.mrf.mxu0
        %v1070 = vadd.f32 %v935, %v1069
        %1071 = vmatprep.mubr.f32.mxu0 0.0
        %v1072 = vand.u32 %v368, 4294901760
        %1073 = vmatmul.mubr.f32.gmra.mxu0 %v1072
        %v1074 = vpop.f32.mrf.mxu0
        %v1075 = vadd.f32 %v942, %v1074
        %v1076 = vpop.f32.mrf.mxu0
        %v1077 = vadd.f32 %v944, %v1076
        %1078 = vdwg.mxu0
        %1079 = vmatprep.subr.mxu0 0.0
        %1080 = vmatpush1.msra.mxu0 0.0
        %1081 = vmatprep.subr.mxu0 0.0
        %1082 = vmatpush1.msra.mxu0 0.0
        %1083 = vmatprep.subr.mxu0 0.0
        %1084 = vmatpush1.msra.mxu0 0.0
        %1085 = vmatprep.subr.mxu0 0.0
        %1086 = vmatpush1.msra.mxu0 0.0
        %1087 = vmatprep.subr.mxu0 0.0
        %1088 = vmatpush1.msra.mxu0 0.0
        %1089 = vmatprep.subr.mxu0 0.0
        %1090 = vmatpush1.msra.mxu0 0.0
        %1091 = vmatprep.subr.mxu0 0.0
        %1092 = vmatpush1.msra.mxu0 0.0
        %1093 = vmatprep.subr.mxu0 0.0
        %1094 = vmatpush1.msra.mxu0 0.0
        %1095 = vmatprep.subr.mxu0 0.0
        %1096 = vmatpush1.msra.mxu0 0.0
        %1097 = vmatprep.subr.mxu0 0.0
        %1098 = vmatpush1.msra.mxu0 0.0
        %1099 = vmatprep.subr.mxu0 0.0
        %1100 = vmatpush1.msra.mxu0 0.0
        %1101 = vmatprep.subr.mxu0 0.0
        %1102 = vmatpush1.msra.mxu0 0.0
        %1103 = vmatprep.subr.mxu0 0.0
        %1104 = vmatpush1.msra.mxu0 0.0
        %1105 = vmatprep.subr.mxu0 0.0
        %1106 = vmatpush1.msra.mxu0 0.0
        %v1107 = vand.u32 %v344, 4294901760
        %1108 = vmatprep.subr.mxu0 %v1107
        %v1109 = vand.u32 %v343, 4294901760
        %1110 = vmatpush1.msra.mxu0 %v1109
        %v1111 = vand.u32 %v342, 4294901760
        %1112 = vmatprep.subr.mxu0 %v1111
        %v1113 = vand.u32 %v341, 4294901760
        %1114 = vmatpush1.msra.mxu0 %v1113
        %1115 = vmatprep.subr.mxu0 0.0
        %1116 = vmatpush2.msra.mxu0 0.0
        %1117 = vmatprep.subr.mxu0 0.0
        %1118 = vmatpush2.msra.mxu0 0.0
        %1119 = vmatprep.subr.mxu0 0.0
        %1120 = vmatpush2.msra.mxu0 0.0
        %1121 = vmatprep.subr.mxu0 0.0
        %1122 = vmatpush2.msra.mxu0 0.0
        %1123 = vmatprep.subr.mxu0 0.0
        %1124 = vmatpush2.msra.mxu0 0.0
        %1125 = vmatprep.subr.mxu0 0.0
        %1126 = vmatpush2.msra.mxu0 0.0
        %1127 = vmatprep.subr.mxu0 0.0
        %1128 = vmatpush2.msra.mxu0 0.0
        %1129 = vmatprep.subr.mxu0 0.0
        %1130 = vmatpush2.msra.mxu0 0.0
        %1131 = vmatprep.subr.mxu0 0.0
        %1132 = vmatpush2.msra.mxu0 0.0
        %1133 = vmatprep.subr.mxu0 0.0
        %1134 = vmatpush2.msra.mxu0 0.0
        %1135 = vmatprep.subr.mxu0 0.0
        %1136 = vmatpush2.msra.mxu0 0.0
        %1137 = vmatprep.subr.mxu0 0.0
        %1138 = vmatpush2.msra.mxu0 0.0
        %1139 = vmatprep.subr.mxu0 0.0
        %1140 = vmatpush2.msra.mxu0 0.0
        %1141 = vmatprep.subr.mxu0 0.0
        %1142 = vmatpush2.msra.mxu0 0.0
        %1143 = vmatprep.subr.mxu0 0.0
        %1144 = vmatpush2.msra.mxu0 0.0
        %1145 = vmatprep.subr.mxu0 0.0
        %1146 = vmatpush2.msra.mxu0 0.0
        %1147 = vmatprep.mubr.f32.mxu0 0.0
        %v1148 = vand.u32 %v347, 4294901760
        %1149 = vmatmul.mubr.f32.gmra.mxu0 %v1148
        %v1150 = vpop.f32.mrf.mxu0
        %v1151 = vadd.f32 %v1026, %v1150
        %v1152 = vpop.f32.mrf.mxu0
        %v1153 = vadd.f32 %v1028, %v1152
        %1154 = vmatprep.mubr.f32.mxu0 0.0
        %v1155 = vand.u32 %v350, 4294901760
        %1156 = vmatmul.mubr.f32.gmra.mxu0 %v1155
        %v1157 = vpop.f32.mrf.mxu0
        %v1158 = vadd.f32 %v1033, %v1157
        %v1159 = vpop.f32.mrf.mxu0
        %v1160 = vadd.f32 %v1035, %v1159
        %1161 = vmatprep.mubr.f32.mxu0 0.0
        %v1162 = vand.u32 %v353, 4294901760
        %1163 = vmatmul.mubr.f32.gmra.mxu0 %v1162
        %v1164 = vpop.f32.mrf.mxu0
        %v1165 = vadd.f32 %v1040, %v1164
        %v1166 = vpop.f32.mrf.mxu0
        %v1167 = vadd.f32 %v1042, %v1166
        %1168 = vmatprep.mubr.f32.mxu0 0.0
        %v1169 = vand.u32 %v356, 4294901760
        %1170 = vmatmul.mubr.f32.gmra.mxu0 %v1169
        %v1171 = vpop.f32.mrf.mxu0
        %v1172 = vadd.f32 %v1047, %v1171
        %v1173 = vpop.f32.mrf.mxu0
        %v1174 = vadd.f32 %v1049, %v1173
        %1175 = vmatprep.mubr.f32.mxu0 0.0
        %v1176 = vand.u32 %v359, 4294901760
        %1177 = vmatmul.mubr.f32.gmra.mxu0 %v1176
        %v1178 = vpop.f32.mrf.mxu0
        %v1179 = vadd.f32 %v1054, %v1178
        %v1180 = vpop.f32.mrf.mxu0
        %v1181 = vadd.f32 %v1056, %v1180
        %1182 = vmatprep.mubr.f32.mxu0 0.0
        %v1183 = vand.u32 %v362, 4294901760
        %1184 = vmatmul.mubr.f32.gmra.mxu0 %v1183
        %v1185 = vpop.f32.mrf.mxu0
        %v1186 = vadd.f32 %v1061, %v1185
        %v1187 = vpop.f32.mrf.mxu0
        %v1188 = vadd.f32 %v1063, %v1187
        %1189 = vmatprep.mubr.f32.mxu0 0.0
        %v1190 = vand.u32 %v365, 4294901760
        %1191 = vmatmul.mubr.f32.gmra.mxu0 %v1190
        %v1192 = vpop.f32.mrf.mxu0
        %v1193 = vadd.f32 %v1068, %v1192
        %v1194 = vpop.f32.mrf.mxu0
        %v1195 = vadd.f32 %v1070, %v1194
        %1196 = vmatprep.mubr.f32.mxu0 0.0
        %v1197 = vand.u32 %v368, 4294901760
        %1198 = vmatmul.mubr.f32.gmra.mxu0 %v1197
        %v1199 = vpop.f32.mrf.mxu0
        %v1200 = vadd.f32 %v1075, %v1199
        %v1201 = vpop.f32.mrf.mxu0
        %v1202 = vadd.f32 %v1077, %v1201
        %1203 = vdwg.mxu0
        %v1204 = vlaneseq
        %v1205 = vshrl.u32 %v1204, 7
        %v1206 = vsub.s32 0, %v1205
        %v1207 = vrot.slane %v282, %v1206
        %v1208 = vlaneseq
        %v1209 = vshrl.u32 %v1208, 7
        %v1210 = vsub.s32 1, %v1209
        %v1211 = vrot.slane %v282, %v1210
        %vm1212 = vcmp.eq.s32.totalorder %v284, %v1207
        %vm1213 = vcmp.eq.s32.totalorder %v284, %v1211
        %vm1214 = vcmp.eq.s32.totalorder %v285, %v1207
        %vm1215 = vcmp.eq.s32.totalorder %v285, %v1211
        %v1217 = vlaneseq
        %v1218 = vshrl.u32 %v1217, 7
        %v1219 = vsub.s32 0, %v1218
        %v1220 = vrot.slane %v280, %v1219
        %v1221 = vlaneseq
        %v1222 = vshrl.u32 %v1221, 7
        %v1223 = vsub.s32 1, %v1222
        %v1224 = vrot.slane %v280, %v1223
        %v1227 = vsel %vm1212, %v1220, 0.0
        %v1228 = vsel %vm1213, %v1224, 0.0
        %v1229 = vsel %vm1214, %v1220, 0.0
        %v1230 = vsel %vm1215, %v1224, 0.0
        %v1231 = vadd.s32 %v282, 1
        %v1232 = vlaneseq
        %v1233 = vshrl.u32 %v1232, 7
        %v1234 = vsub.s32 0, %v1233
        %v1235 = vrot.slane %v1231, %v1234
        %v1236 = vlaneseq
        %v1237 = vshrl.u32 %v1236, 7
        %v1238 = vsub.s32 1, %v1237
        %v1239 = vrot.slane %v1231, %v1238
        %vm1240 = vcmp.eq.s32.totalorder %v284, %v1235
        %vm1241 = vcmp.eq.s32.totalorder %v284, %v1239
        %vm1242 = vcmp.eq.s32.totalorder %v285, %v1235
        %vm1243 = vcmp.eq.s32.totalorder %v285, %v1239
        %v1245 = vlaneseq
        %v1246 = vshrl.u32 %v1245, 7
        %v1247 = vsub.s32 0, %v1246
        %v1248 = vrot.slane %v279, %v1247
        %v1249 = vlaneseq
        %v1250 = vshrl.u32 %v1249, 7
        %v1251 = vsub.s32 1, %v1250
        %v1252 = vrot.slane %v279, %v1251
        %v1255 = vsel %vm1240, %v1248, 0.0
        %v1256 = vsel %vm1241, %v1252, 0.0
        %v1257 = vsel %vm1242, %v1248, 0.0
        %v1258 = vsel %vm1243, %v1252, 0.0
        %v1259 = vadd.f32 %v1227, %v1255
        %v1260 = vadd.f32 %v1228, %v1256
        %v1261 = vadd.f32 %v1229, %v1257
        %v1262 = vadd.f32 %v1230, %v1258
        %v1263 = vmul.f32 %v1151, %v1259
        %v1264 = vmul.f32 %v1153, %v1260
        %v1265 = vmul.f32 %v1158, %v1261
        %v1266 = vmul.f32 %v1160, %v1262
        %v1267 = vmul.f32 %v1165, %v1259
        %v1268 = vmul.f32 %v1167, %v1260
        %v1269 = vmul.f32 %v1172, %v1261
        %v1270 = vmul.f32 %v1174, %v1262
        %v1271 = vmul.f32 %v1179, %v1259
        %v1272 = vmul.f32 %v1181, %v1260
        %v1273 = vmul.f32 %v1186, %v1261
        %v1274 = vmul.f32 %v1188, %v1262
        %v1275 = vmul.f32 %v1193, %v1259
        %v1276 = vmul.f32 %v1195, %v1260
        %v1277 = vmul.f32 %v1200, %v1261
        %v1278 = vmul.f32 %v1202, %v1262
        %v1279 = vadd.f32 %v1263, %v1265
        %v1280 = vrot.slane %v1279, 4
        %v1281 = vadd.f32 %v1279, %v1280
        %v1282 = vrot.slane %v1281, 2
        %v1283 = vadd.f32 %v1281, %v1282
        %v1284 = vrot.slane %v1283, 1
        %v1285 = vadd.f32 %v1283, %v1284
        %v1286 = vadd.f32 %v1264, %v1266
        %v1287 = vrot.slane %v1286, 4
        %v1288 = vadd.f32 %v1286, %v1287
        %v1289 = vrot.slane %v1288, 2
        %v1290 = vadd.f32 %v1288, %v1289
        %v1291 = vrot.slane %v1290, 1
        %v1292 = vadd.f32 %v1290, %v1291
        %v1293 = vadd.f32 %v1267, %v1269
        %v1294 = vrot.slane %v1293, 4
        %v1295 = vadd.f32 %v1293, %v1294
        %v1296 = vrot.slane %v1295, 2
        %v1297 = vadd.f32 %v1295, %v1296
        %v1298 = vrot.slane %v1297, 1
        %v1299 = vadd.f32 %v1297, %v1298
        %v1300 = vadd.f32 %v1268, %v1270
        %v1301 = vrot.slane %v1300, 4
        %v1302 = vadd.f32 %v1300, %v1301
        %v1303 = vrot.slane %v1302, 2
        %v1304 = vadd.f32 %v1302, %v1303
        %v1305 = vrot.slane %v1304, 1
        %v1306 = vadd.f32 %v1304, %v1305
        %v1307 = vadd.f32 %v1271, %v1273
        %v1308 = vrot.slane %v1307, 4
        %v1309 = vadd.f32 %v1307, %v1308
        %v1310 = vrot.slane %v1309, 2
        %v1311 = vadd.f32 %v1309, %v1310
        %v1312 = vrot.slane %v1311, 1
        %v1313 = vadd.f32 %v1311, %v1312
        %v1314 = vadd.f32 %v1272, %v1274
        %v1315 = vrot.slane %v1314, 4
        %v1316 = vadd.f32 %v1314, %v1315
        %v1317 = vrot.slane %v1316, 2
        %v1318 = vadd.f32 %v1316, %v1317
        %v1319 = vrot.slane %v1318, 1
        %v1320 = vadd.f32 %v1318, %v1319
        %v1321 = vadd.f32 %v1275, %v1277
        %v1322 = vrot.slane %v1321, 4
        %v1323 = vadd.f32 %v1321, %v1322
        %v1324 = vrot.slane %v1323, 2
        %v1325 = vadd.f32 %v1323, %v1324
        %v1326 = vrot.slane %v1325, 1
        %v1327 = vadd.f32 %v1325, %v1326
        %v1328 = vadd.f32 %v1276, %v1278
        %v1329 = vrot.slane %v1328, 4
        %v1330 = vadd.f32 %v1328, %v1329
        %v1331 = vrot.slane %v1330, 2
        %v1332 = vadd.f32 %v1330, %v1331
        %v1333 = vrot.slane %v1332, 1
        %v1334 = vadd.f32 %v1332, %v1333
        %v1343 = vcombine.low %v1285, %v1292
        %v1344 = vcombine.low %v1299, %v1306
        %v1345 = vcombine.low %v1313, %v1320
        %v1346 = vcombine.low %v1327, %v1334
        %v1347 = vrot.slane %v1344, 7
        %vm1348 = vcmask 1041409
        %v1349 = vsel %vm1348, %v1347, %v1343
        %vm1350 = vcmask 1045509
        %v1351 = vsel %vm1350, %v1347, %v1349
        %v1352 = vrot.slane %v1345, 6
        %vm1353 = vcmask 1042434
        %v1354 = vsel %vm1353, %v1352, %v1351
        %vm1355 = vcmask 1046534
        %v1356 = vsel %vm1355, %v1352, %v1354
        %v1357 = vrot.slane %v1346, 5
        %vm1358 = vcmask 1043459
        %v1359 = vsel %vm1358, %v1357, %v1356
        %vm1360 = vcmask 1047559
        %v1361 = vsel %vm1360, %v1357, %v1359
        %1363 = vst [vmem:[%s219] sm:$0xff] %v1361
        %s1364 = sand.u32 %s119, 1
        %s1365 = scalar_lea.sflag [#allocation3], %s1364
        %s1366 = sand.u32 %s119, 1
        %s1367 = smul.addr %s1366, 8
        %s1368 = scalar_lea.vmem [#allocation2], %s1367
        // Predicated region
        $region33: #{tpu_custom_call.1} parent=31 // pred_check
          %p1369 = pneg %p129
        $region34: #{tpu_custom_call.1} parent=31 // pred_check_branch
          %1371 = sbr.rel (%p1369) target = $region36
        $region35: #{tpu_custom_call.1} parent=31 // pred_region
          %s1372 = smul.u32 2, %s22
          %s1374 = ssub.s32 128, 128
          %1375 = vsyncadd %s1365, %s1374
          %s1376 = smul.addr %s21, 2
          %s1377 = sadd.s32 %s1372, %s1376
          %s1378 = smul.addr %s1377, 64
          %s1379 = scalar_lea.hbm %s3, %s1378
          %s1381 = sshll.u32 %s1368, 4
          %s1382 = int_to_ptr.vmem [resolvable:$true] %s1381
          %1384 = dma.vmem_to_hbm [thread:$0]  %s1382, 128, %s1379, %s1365
        $region36: #{tpu_custom_call.1} parent=31 // pred_fallthru
          _
      $region32: #{tpu_custom_call.1} parent=5 // pred_fallthru
        _
      %p1385 = scmp.le.s32.totalorder 2, %s12
      // Predicated region
      $region37: #{tpu_custom_call.1} parent=5 // pred_check
        %p1386 = pneg %p1385
      $region38: #{tpu_custom_call.1} parent=5 // pred_check_branch
        %1388 = sbr.rel (%p1386) target = $region40
      $region39: #{tpu_custom_call.1} parent=5 // pred_region
        %s1389 = ssub.s32 %s12, 2
        // Predicated region
        $region41: #{tpu_custom_call.1} parent=39 // pred_check
          %p1390 = pneg %p135
        $region42: #{tpu_custom_call.1} parent=39 // pred_check_branch
          %1392 = sbr.rel (%p1390) target = $region44
        $region43: #{tpu_custom_call.1} parent=39 // pred_region
          %s1393 = sand.u32 %s120, 1
          %s1394 = scalar_lea.sflag [#allocation3], %s1393
          %s1395 = sand.u32 %s120, 1
          %s1396 = smul.addr %s1395, 8
          %s1397 = scalar_lea.vmem [#allocation2], %s1396
          %1398 = dma.done %s1394, 128
        $region44: #{tpu_custom_call.1} parent=39 // pred_fallthru
          _
      $region40: #{tpu_custom_call.1} parent=5 // pred_fallthru
        _
    $region6: #{tpu_custom_call.1} parent=1 // loop_footer
      %s16 = sadd.s32 1, %s12
    $region7: #{tpu_custom_call.1} parent=1 // loop_footer_branch
      %11 = sbr.rel target = $region3
    $region8: #{tpu_custom_call.1} parent=1 // loop_exit
      _
    %1399 = vsyncpa [#allocation3], 1
    %s1400 = scalar_lea.sflag [#allocation3], 1
    %1401 = vsyncpa %s1400, 1

</llo_original>
